<compile_context>
chip_gen: v7x
topology: tpu7x:2x2x1
jax: 0.10.0
libtpu: 0.0.40
codegen_flags: <defaults>
</compile_context>

<pallas_src>
import functools

import jax
import jax.numpy as jnp
from jax.experimental import pallas as pl
from jax.experimental.pallas import tpu as pltpu


# ------------------------------------------------------------------
# Fused kernel: (1x1 conv + BN + ReLU) x 2, per (batch, spatial-tile) block,
# hidden dim processed in chunks so the f32 intermediate stays in registers.
# ------------------------------------------------------------------
def _key_encoder_kernel(x_ref, w1_ref, b1_ref, w2_ref, b2_ref, o_ref, *, chunk):
    # x_ref : (Cin,  TM)   f32   (cast to bf16 here, not in the wrapper)
    # w1_ref: (Chid, Cin)  bf16
    # b1_ref: (Chid, 1)    f32   (BN folded)
    # w2_ref: (Cout, Chid) bf16
    # b2_ref: (Cout, 1)    f32   (BN folded)
    # o_ref : (Cout, TM)   out dtype (default bf16)
    cdt = w1_ref.dtype
    x = x_ref[...].astype(cdt)                       # in-kernel f32 -> bf16 cast (VPU)

    chid = w1_ref.shape[0]
    n_chunks = chid // chunk

    acc = None
    for c in range(n_chunks):                        # short static loop (4 iters)
        lo = c * chunk
        h = jnp.dot(w1_ref[lo:lo + chunk, :], x,
                    preferred_element_type=jnp.float32)          # (chunk, TM) f32
        h = jnp.maximum(h + b1_ref[lo:lo + chunk, :], 0.0)       # bias + ReLU in f32
        h = h.astype(cdt)                                        # bf16 for MXU only
        part = jnp.dot(w2_ref[:, lo:lo + chunk], h,
                       preferred_element_type=jnp.float32)       # (Cout, TM) f32
        acc = part if acc is None else acc + part

    acc = jnp.maximum(acc + b2_ref[...], 0.0)
    o_ref[...] = acc.astype(o_ref.dtype)


# ------------------------------------------------------------------
# Tiling heuristics
# ------------------------------------------------------------------
def _pick_spatial_tile(m, n_batch):
    """Lane-dense spatial tile (multiple of 128) with >=2 total grid steps if possible."""
    if m < 128:
        return m                                     # block == full dim (legal)
    cands = (2048, 1024, 512, 256, 128)
    tm = next((t for t in cands if m % t == 0), None)    # exact divisor -> no tail
    if tm is None:
        tm = next(t for t in cands if t <= m)             # masked tail via cdiv grid
    # v7x has 2 TensorCores: make sure the grid has >= 2 steps to shard.
    if n_batch == 1 and pl.cdiv(m, tm) < 2 and m >= 256:
        tm = max(128, (m // 2 // 128) * 128)
    return tm


def _pick_hidden_chunk(chid):
    for c in (128, 256, 64, 32):
        if chid % c == 0:
            return c
    return chid


# ------------------------------------------------------------------
# Forward wrapper
# ------------------------------------------------------------------
def key_encoder_forward(x_nchw, params, *,
                        compute_dtype=jnp.bfloat16,
                        out_dtype=jnp.bfloat16):
    """KeyEncoder.forward: two (1x1 conv -> BN(inference) -> ReLU) stages."""
    N, Cin, H, W = x_nchw.shape
    M = H * W
    TM = _pick_spatial_tile(M, N)
    num_m = pl.cdiv(M, TM)

    (w1, b1), (w2, b2) = (_fold_bn(p) for p in params)   # (Cout, Cin), (Cout,)
    Chid = w1.shape[0]
    Cout = w2.shape[0]
    chunk = _pick_hidden_chunk(Chid)

    x = x_nchw.reshape(N, Cin, M)                          # NCHW -> (N, C, H*W), free; stays f32
    w1c = w1.astype(compute_dtype)                         # weights are tiny; cast in wrapper
    w2c = w2.astype(compute_dtype)
    b1c = b1.reshape(Chid, 1).astype(jnp.float32)
    b2c = b2.reshape(Cout, 1).astype(jnp.float32)

    kernel = functools.partial(_key_encoder_kernel, chunk=chunk)

    out = pl.pallas_call(
        kernel,
        out_shape=jax.ShapeDtypeStruct((N, Cout, M), out_dtype),
        grid=(N, num_m),
        in_specs=[
            pl.BlockSpec((None, Cin, TM), lambda n, m: (n, 0, m)),   # x tile (f32)
            pl.BlockSpec((Chid, Cin), lambda n, m: (0, 0)),          # W1 (constant)
            pl.BlockSpec((Chid, 1), lambda n, m: (0, 0)),            # b1 (constant)
            pl.BlockSpec((Cout, Chid), lambda n, m: (0, 0)),         # W2 (constant)
            pl.BlockSpec((Cout, 1), lambda n, m: (0, 0)),            # b2 (constant)
        ],
        out_specs=pl.BlockSpec((None, Cout, TM), lambda n, m: (n, 0, m)),
        compiler_params=pltpu.CompilerParams(
            dimension_semantics=("parallel", "parallel")),
    )(x, w1c, b1c, w2c, b2c)

    return out.reshape(N, Cout, H, W)                      # still NCHW, free reshape


# ------------------------------------------------------------------
# Parameter setup (deterministic, synthetic) + BN folding
# ------------------------------------------------------------------
def _make_cbr_params(key, cin, cout):
    ks = jax.random.split(key, 6)
    w = 0.1 * jax.random.normal(ks[0], (cout, cin), jnp.float32)   # 1x1 conv, squeezed
    b = 0.1 * jax.random.normal(ks[1], (cout,), jnp.float32)
    gamma = 1.0 + 0.1 * jax.random.normal(ks[2], (cout,), jnp.float32)
    beta = 0.1 * jax.random.normal(ks[3], (cout,), jnp.float32)
    run_mean = 0.1 * jax.random.normal(ks[4], (cout,), jnp.float32)
    run_var = 1.0 + 0.1 * jnp.abs(jax.random.normal(ks[5], (cout,), jnp.float32))
    return dict(w=w, b=b, gamma=gamma, beta=beta, mean=run_mean, var=run_var)


def _fold_bn(p, eps=1e-5):
    s = p["gamma"] / jnp.sqrt(p["var"] + eps)
    w_eff = p["w"] * s[:, None]
    b_eff = (p["b"] - p["mean"]) * s + p["beta"]
    return w_eff, b_eff


# ------------------------------------------------------------------
# Pure-JAX reference (same bf16-matmul / f32-accumulate numerics)
# ------------------------------------------------------------------
def _reference_forward(x_nchw, params, compute_dtype=jnp.bfloat16,
                       out_dtype=jnp.bfloat16):
    N, Cin, H, W = x_nchw.shape
    x = x_nchw.reshape(N, Cin, H * W)
    for p in params:
        w_eff, b_eff = _fold_bn(p)
        x = jnp.einsum("oc,ncm->nom",
                       w_eff.astype(compute_dtype), x.astype(compute_dtype),
                       preferred_element_type=jnp.float32)
        x = jnp.maximum(x + b_eff[None, :, None], 0.0)
    return x.astype(out_dtype).reshape(N, x.shape[1], H, W)


# ------------------------------------------------------------------
if __name__ == "__main__":
    key = jax.random.PRNGKey(0)
    k_x, k1, k2 = jax.random.split(key, 3)

    # KeyEncoder(in_ch, out_ch): in_ch -> 512 (fixed by the module) -> out_ch
    N, in_ch, hidden, out_ch, H, W = 2, 16, 512, 64, 16, 16
    x = jax.random.normal(k_x, (N, in_ch, H, W), jnp.float32)      # PyTorch NCHW

    params = [
        _make_cbr_params(k1, in_ch, hidden),    # conv2DBatchNormRelu(in_ch, 512, 1,1,0)
        _make_cbr_params(k2, hidden, out_ch),   # conv2DBatchNormRelu(512, out_ch, 1,1,0)
    ]

    fwd = jax.jit(key_encoder_forward)
    out = jax.block_until_ready(fwd(x, params))

    ref = _reference_forward(x, params)
    assert out.shape == (N, out_ch, H, W), out.shape
    assert out.dtype == jnp.bfloat16, out.dtype
    out_f32 = out.astype(jnp.float32)
    ref_f32 = ref.astype(jnp.float32)
    max_err = float(jnp.max(jnp.abs(out_f32 - ref_f32)))
    assert jnp.allclose(out_f32, ref_f32, atol=3e-2, rtol=3e-2), \
        f"mismatch vs reference (max err {max_err})"

    print("KERNEL_OK")
</pallas_src>

<mosaic_0001>
module attributes {stable_mosaic.version = 11 : i64} {
  func.func @_key_encoder_kernel(%arg0: i32, %arg1: i32, %arg2: memref<1x16x256xf32, #tpu.memory_space<vmem>>, %arg3: memref<512x16xbf16, #tpu.memory_space<vmem>>, %arg4: memref<512x1xf32, #tpu.memory_space<vmem>>, %arg5: memref<64x512xbf16, #tpu.memory_space<vmem>>, %arg6: memref<64x1xf32, #tpu.memory_space<vmem>>, %arg7: memref<1x64x256xbf16, #tpu.memory_space<vmem>>) attributes {dimension_semantics = [#tpu.dimension_semantics<parallel>, #tpu.dimension_semantics<parallel>], iteration_bounds = array<i64: 2, 1>, scalar_prefetch = 0 : i64, scratch_operands = 0 : i64, tpu.core_type = #tpu.core_type<tc>, window_params = [{transform_indices = @transform_0, window_bounds = array<i64: 1, 16, 256>}, {pipeline_mode = #tpu.pipeline_mode<synchronous>, transform_indices = @transform_1, window_bounds = array<i64: 512, 16>}, {pipeline_mode = #tpu.pipeline_mode<synchronous>, transform_indices = @transform_2, window_bounds = array<i64: 512, 1>}, {pipeline_mode = #tpu.pipeline_mode<synchronous>, transform_indices = @transform_3, window_bounds = array<i64: 64, 512>}, {pipeline_mode = #tpu.pipeline_mode<synchronous>, transform_indices = @transform_4, window_bounds = array<i64: 64, 1>}, {transform_indices = @transform_5, window_bounds = array<i64: 1, 64, 256>}]} {
    %c0 = arith.constant 0 : index
    %c0_0 = arith.constant 0 : index
    %c0_1 = arith.constant 0 : index
    %0 = vector.load %arg2[%c0, %c0_0, %c0_1] : memref<1x16x256xf32, #tpu.memory_space<vmem>>, vector<1x16x256xf32>
    %1 = vector.shape_cast %0 : vector<1x16x256xf32> to vector<16x256xf32>
    %2 = arith.truncf %1 : vector<16x256xf32> to vector<16x256xbf16>
    %c0_2 = arith.constant 0 : index
    %c0_3 = arith.constant 0 : index
    %3 = vector.load %arg3[%c0_2, %c0_3] : memref<512x16xbf16, #tpu.memory_space<vmem>>, vector<128x16xbf16>
    %cst = arith.constant dense<0.000000e+00> : vector<128x256xf32>
    %4 = tpu.matmul %3, %2, %cst {dimension_numbers = #tpu.dot_dimension_numbers<[1], [0], [0], [1], [0, 0, 1, 1], [], []>} : vector<128x16xbf16>, vector<16x256xbf16>, vector<128x256xf32> -> vector<128x256xf32>
    %c0_4 = arith.constant 0 : index
    %c0_5 = arith.constant 0 : index
    %5 = vector.load %arg4[%c0_4, %c0_5] : memref<512x1xf32, #tpu.memory_space<vmem>>, vector<128x1xf32>
    %6 = vector.broadcast %5 : vector<128x1xf32> to vector<128x256xf32>
    %7 = arith.addf %4, %6 : vector<128x256xf32>
    %cst_6 = arith.constant 0.000000e+00 : f32
    %8 = vector.broadcast %cst_6 : f32 to vector<128x256xf32>
    %9 = arith.maximumf %7, %8 : vector<128x256xf32>
    %10 = arith.truncf %9 : vector<128x256xf32> to vector<128x256xbf16>
    %c0_7 = arith.constant 0 : index
    %c0_8 = arith.constant 0 : index
    %11 = vector.load %arg5[%c0_7, %c0_8] : memref<64x512xbf16, #tpu.memory_space<vmem>>, vector<64x128xbf16>
    %cst_9 = arith.constant dense<0.000000e+00> : vector<64x256xf32>
    %12 = tpu.matmul %11, %10, %cst_9 {dimension_numbers = #tpu.dot_dimension_numbers<[1], [0], [0], [1], [0, 0, 1, 1], [], []>} : vector<64x128xbf16>, vector<128x256xbf16>, vector<64x256xf32> -> vector<64x256xf32>
    %c128 = arith.constant 128 : index
    %c0_10 = arith.constant 0 : index
    %13 = vector.load %arg3[%c128, %c0_10] : memref<512x16xbf16, #tpu.memory_space<vmem>>, vector<128x16xbf16>
    %cst_11 = arith.constant dense<0.000000e+00> : vector<128x256xf32>
    %14 = tpu.matmul %13, %2, %cst_11 {dimension_numbers = #tpu.dot_dimension_numbers<[1], [0], [0], [1], [0, 0, 1, 1], [], []>} : vector<128x16xbf16>, vector<16x256xbf16>, vector<128x256xf32> -> vector<128x256xf32>
    %c128_12 = arith.constant 128 : index
    %c0_13 = arith.constant 0 : index
    %15 = vector.load %arg4[%c128_12, %c0_13] : memref<512x1xf32, #tpu.memory_space<vmem>>, vector<128x1xf32>
    %16 = vector.broadcast %15 : vector<128x1xf32> to vector<128x256xf32>
    %17 = arith.addf %14, %16 : vector<128x256xf32>
    %cst_14 = arith.constant 0.000000e+00 : f32
    %18 = vector.broadcast %cst_14 : f32 to vector<128x256xf32>
    %19 = arith.maximumf %17, %18 : vector<128x256xf32>
    %20 = arith.truncf %19 : vector<128x256xf32> to vector<128x256xbf16>
    %c0_15 = arith.constant 0 : index
    %c128_16 = arith.constant 128 : index
    %21 = vector.load %arg5[%c0_15, %c128_16] : memref<64x512xbf16, #tpu.memory_space<vmem>>, vector<64x128xbf16>
    %cst_17 = arith.constant dense<0.000000e+00> : vector<64x256xf32>
    %22 = tpu.matmul %21, %20, %cst_17 {dimension_numbers = #tpu.dot_dimension_numbers<[1], [0], [0], [1], [0, 0, 1, 1], [], []>} : vector<64x128xbf16>, vector<128x256xbf16>, vector<64x256xf32> -> vector<64x256xf32>
    %23 = arith.addf %12, %22 : vector<64x256xf32>
    %c256 = arith.constant 256 : index
    %c0_18 = arith.constant 0 : index
    %24 = vector.load %arg3[%c256, %c0_18] : memref<512x16xbf16, #tpu.memory_space<vmem>>, vector<128x16xbf16>
    %cst_19 = arith.constant dense<0.000000e+00> : vector<128x256xf32>
    %25 = tpu.matmul %24, %2, %cst_19 {dimension_numbers = #tpu.dot_dimension_numbers<[1], [0], [0], [1], [0, 0, 1, 1], [], []>} : vector<128x16xbf16>, vector<16x256xbf16>, vector<128x256xf32> -> vector<128x256xf32>
    %c256_20 = arith.constant 256 : index
    %c0_21 = arith.constant 0 : index
    %26 = vector.load %arg4[%c256_20, %c0_21] : memref<512x1xf32, #tpu.memory_space<vmem>>, vector<128x1xf32>
    %27 = vector.broadcast %26 : vector<128x1xf32> to vector<128x256xf32>
    %28 = arith.addf %25, %27 : vector<128x256xf32>
    %cst_22 = arith.constant 0.000000e+00 : f32
    %29 = vector.broadcast %cst_22 : f32 to vector<128x256xf32>
    %30 = arith.maximumf %28, %29 : vector<128x256xf32>
    %31 = arith.truncf %30 : vector<128x256xf32> to vector<128x256xbf16>
    %c0_23 = arith.constant 0 : index
    %c256_24 = arith.constant 256 : index
    %32 = vector.load %arg5[%c0_23, %c256_24] : memref<64x512xbf16, #tpu.memory_space<vmem>>, vector<64x128xbf16>
    %cst_25 = arith.constant dense<0.000000e+00> : vector<64x256xf32>
    %33 = tpu.matmul %32, %31, %cst_25 {dimension_numbers = #tpu.dot_dimension_numbers<[1], [0], [0], [1], [0, 0, 1, 1], [], []>} : vector<64x128xbf16>, vector<128x256xbf16>, vector<64x256xf32> -> vector<64x256xf32>
    %34 = arith.addf %23, %33 : vector<64x256xf32>
    %c384 = arith.constant 384 : index
    %c0_26 = arith.constant 0 : index
    %35 = vector.load %arg3[%c384, %c0_26] : memref<512x16xbf16, #tpu.memory_space<vmem>>, vector<128x16xbf16>
    %cst_27 = arith.constant dense<0.000000e+00> : vector<128x256xf32>
    %36 = tpu.matmul %35, %2, %cst_27 {dimension_numbers = #tpu.dot_dimension_numbers<[1], [0], [0], [1], [0, 0, 1, 1], [], []>} : vector<128x16xbf16>, vector<16x256xbf16>, vector<128x256xf32> -> vector<128x256xf32>
    %c384_28 = arith.constant 384 : index
    %c0_29 = arith.constant 0 : index
    %37 = vector.load %arg4[%c384_28, %c0_29] : memref<512x1xf32, #tpu.memory_space<vmem>>, vector<128x1xf32>
    %38 = vector.broadcast %37 : vector<128x1xf32> to vector<128x256xf32>
    %39 = arith.addf %36, %38 : vector<128x256xf32>
    %cst_30 = arith.constant 0.000000e+00 : f32
    %40 = vector.broadcast %cst_30 : f32 to vector<128x256xf32>
    %41 = arith.maximumf %39, %40 : vector<128x256xf32>
    %42 = arith.truncf %41 : vector<128x256xf32> to vector<128x256xbf16>
    %c0_31 = arith.constant 0 : index
    %c384_32 = arith.constant 384 : index
    %43 = vector.load %arg5[%c0_31, %c384_32] : memref<64x512xbf16, #tpu.memory_space<vmem>>, vector<64x128xbf16>
    %cst_33 = arith.constant dense<0.000000e+00> : vector<64x256xf32>
    %44 = tpu.matmul %43, %42, %cst_33 {dimension_numbers = #tpu.dot_dimension_numbers<[1], [0], [0], [1], [0, 0, 1, 1], [], []>} : vector<64x128xbf16>, vector<128x256xbf16>, vector<64x256xf32> -> vector<64x256xf32>
    %45 = arith.addf %34, %44 : vector<64x256xf32>
    %c0_34 = arith.constant 0 : index
    %c0_35 = arith.constant 0 : index
    %46 = vector.load %arg6[%c0_34, %c0_35] : memref<64x1xf32, #tpu.memory_space<vmem>>, vector<64x1xf32>
    %47 = vector.broadcast %46 : vector<64x1xf32> to vector<64x256xf32>
    %48 = arith.addf %45, %47 : vector<64x256xf32>
    %cst_36 = arith.constant 0.000000e+00 : f32
    %49 = vector.broadcast %cst_36 : f32 to vector<64x256xf32>
    %50 = arith.maximumf %48, %49 : vector<64x256xf32>
    %51 = arith.truncf %50 : vector<64x256xf32> to vector<64x256xbf16>
    %c0_37 = arith.constant 0 : index
    %c0_38 = arith.constant 0 : index
    %c0_39 = arith.constant 0 : index
    %52 = vector.load %arg7[%c0_37, %c0_38, %c0_39] : memref<1x64x256xbf16, #tpu.memory_space<vmem>>, vector<1x64x256xbf16>
    %53 = vector.shape_cast %52 : vector<1x64x256xbf16> to vector<64x256xbf16>
    %54 = vector.shape_cast %51 : vector<64x256xbf16> to vector<1x64x256xbf16>
    tpu.vector_store %arg7[%c0_37, %c0_38, %c0_39], %54 {strides = array<i32>} : memref<1x64x256xbf16, #tpu.memory_space<vmem>>, vector<1x64x256xbf16>,
    return
  }
  func.func @transform_0(%arg0: i32, %arg1: i32) -> (i32, i32, i32) {
    %c0_i32 = arith.constant 0 : i32
    %c0_i32_0 = arith.constant 0 : i32
    return %arg0, %c0_i32, %arg1 : i32, i32, i32
  }
  func.func @transform_1(%arg0: i32, %arg1: i32) -> (i32, i32) {
    %c0_i32 = arith.constant 0 : i32
    %c0_i32_0 = arith.constant 0 : i32
    %c0_i32_1 = arith.constant 0 : i32
    return %c0_i32, %c0_i32_0 : i32, i32
  }
  func.func @transform_2(%arg0: i32, %arg1: i32) -> (i32, i32) {
    %c0_i32 = arith.constant 0 : i32
    %c0_i32_0 = arith.constant 0 : i32
    %c0_i32_1 = arith.constant 0 : i32
    return %c0_i32, %c0_i32_0 : i32, i32
  }
  func.func @transform_3(%arg0: i32, %arg1: i32) -> (i32, i32) {
    %c0_i32 = arith.constant 0 : i32
    %c0_i32_0 = arith.constant 0 : i32
    %c0_i32_1 = arith.constant 0 : i32
    return %c0_i32, %c0_i32_0 : i32, i32
  }
  func.func @transform_4(%arg0: i32, %arg1: i32) -> (i32, i32) {
    %c0_i32 = arith.constant 0 : i32
    %c0_i32_0 = arith.constant 0 : i32
    %c0_i32_1 = arith.constant 0 : i32
    return %c0_i32, %c0_i32_0 : i32, i32
  }
  func.func @transform_5(%arg0: i32, %arg1: i32) -> (i32, i32, i32) {
    %c0_i32 = arith.constant 0 : i32
    %c0_i32_0 = arith.constant 0 : i32
    return %arg0, %c0_i32, %arg1 : i32, i32, i32
  }
}

</mosaic_0001>

<llo_original>
// kernel: key_encoder_forward.1
$region0: #{key_encoder_forward.1}
  #allocation0 [shape = 'u32[]', space=smem, size = 0x4, offset = 0x4, fixed_abs, tag = 'smem constant byte address 0x4 - core index']
  #allocation1 [shape = 'u32[144,128]{1,0:T(1,128)}', space=vmem, size = 0x12000, scoped, tag = 'internal scratch']
  %s0 = inlined_call_operand.vmem [shape: f32[2,16,256], index: 0, kind: input, shape index: {}]
  %s1 = inlined_call_operand.vmem [shape: bf16[512,16], index: 1, kind: input, shape index: {}]
  %s2 = inlined_call_operand.vmem [shape: f32[512,1], index: 2, kind: input, shape index: {}]
  %s3 = inlined_call_operand.vmem [shape: bf16[64,512], index: 3, kind: input, shape index: {}]
  %s4 = inlined_call_operand.vmem [shape: f32[64,1], index: 4, kind: input, shape index: {}]
  %s5 = inlined_call_operand.vmem [shape: bf16[2,64,256], index: 5, kind: output, shape index: {}]
  %s6 = sld [smem:[#allocation0]]
  $region53: #{key_encoder_forward.1} parent=0
    _
  %s8 = ssub.s32 1, %s6
  %s9 = scalar_select 0, %s8, %s6
  loop: start=0, step=1, limit=4
  $region2: #{key_encoder_forward.1} parent=0 // loop_pre_header
    _
  $region3: #{key_encoder_forward.1} parent=0 // loop_header
    %s11 = sphi 0, %s15
    %p12 = scmp.ge.s32.totalorder %s11, 4
    %s18 = sphi 0, %s30
    %s19 = sphi 0, %s26
    %s20 = sphi 0, %s18
    %s21 = sphi 0, %s19
    %s22 = sphi 0, %s20
    %s23 = sphi 0, %s21
    %s35 = sphi 0, %s37
    %s38 = sphi 0, %s35
    %s39 = sphi 0, %s38
    %s55 = sphi 0, %s39
    %s59 = sphi 0, %s59
    %s61 = sphi 0, %s59
    %s62 = sphi 0, %s61
    %s76 = sphi 0, %s62
    %s80 = sphi 0, %s80
    %s82 = sphi 0, %s80
    %s83 = sphi 0, %s82
    %s97 = sphi 0, %s83
    %s101 = sphi 0, %s101
    %s103 = sphi 0, %s101
    %s104 = sphi 0, %s103
    %s118 = sphi 0, %s104
    %s122 = sphi 0, %s122
    %s124 = sphi 0, %s122
    %s125 = sphi 0, %s124
    %s139 = sphi 0, %s125
    %s147 = sphi 0, %s149
    %s150 = sphi 0, %s147
    %s151 = sphi 0, %s150
    %s167 = sphi 0, %s151
  $region4: #{key_encoder_forward.1} parent=0 // loop_header_branch
    %14 = sbr.rel (%p12) target = $region8
  $region5: #{key_encoder_forward.1} parent=0 // loop_body
    %s16 = ssub.s32 %s11, 1
    %s17 = ssub.s32 %s11, 2
    %s24 = sadd.s32 1, %s19
    %p25 = scmp.ge.s32.totalorder %s24, 1
    %s26 = scalar_select %p25, 0, %s24
    %s27 = sadd.s32 1, %s18
    %s28 = scalar_select %p25, %s27, %s18
    %p29 = scmp.ge.s32.totalorder %s28, 2
    %s30 = scalar_select %p29, 0, %s28
    %s31 = ssub.s32 %s18, %s30
    %s32 = ssub.s32 %s19, %s26
    %s33 = sor.u32 %s31, %s32
    %p34 = scmp.eq.s32.totalorder %s33, 0
    %s36 = sadd.s32 %s35, 1
    %s37 = scalar_select %p34, %s35, %s36
    %p40 = pneg %p34
    %p41 = scmp.eq.s32.totalorder %s11, 1
    %p42 = por %p40, %p41
    %p43 = scmp.ne.s32.totalorder %s35, %s38
    %p44 = scmp.eq.s32.totalorder %s11, 0
    %p45 = por %p43, %p44
    %p46 = scmp.ne.s32.totalorder %s35, %s38
    %p47 = scmp.eq.s32.totalorder %s16, 1
    %p48 = por %p46, %p47
    %p49 = scmp.ne.s32.totalorder %s38, %s39
    %p50 = scmp.eq.s32.totalorder %s16, 0
    %p51 = por %p49, %p50
    %p52 = scmp.ne.s32.totalorder %s38, %s39
    %p53 = scmp.eq.s32.totalorder %s17, 1
    %p54 = por %p52, %p53
    %p56 = scmp.ne.s32.totalorder %s39, %s55
    %p57 = scmp.eq.s32.totalorder %s17, 0
    %p58 = por %p56, %p57
    %s60 = sadd.s32 %s59, 1
    %p63 = scmp.eq.s32.totalorder %s11, 1
    %p64 = scmp.ne.s32.totalorder %s59, %s61
    %p65 = scmp.eq.s32.totalorder %s11, 0
    %p66 = por %p64, %p65
    %p67 = scmp.ne.s32.totalorder %s59, %s61
    %p68 = scmp.eq.s32.totalorder %s16, 1
    %p69 = por %p67, %p68
    %p70 = scmp.ne.s32.totalorder %s61, %s62
    %p71 = scmp.eq.s32.totalorder %s16, 0
    %p72 = por %p70, %p71
    %p73 = scmp.ne.s32.totalorder %s61, %s62
    %p74 = scmp.eq.s32.totalorder %s17, 1
    %p75 = por %p73, %p74
    %p77 = scmp.ne.s32.totalorder %s62, %s76
    %p78 = scmp.eq.s32.totalorder %s17, 0
    %p79 = por %p77, %p78
    %s81 = sadd.s32 %s80, 1
    %p84 = scmp.eq.s32.totalorder %s11, 1
    %p85 = scmp.ne.s32.totalorder %s80, %s82
    %p86 = scmp.eq.s32.totalorder %s11, 0
    %p87 = por %p85, %p86
    %p88 = scmp.ne.s32.totalorder %s80, %s82
    %p89 = scmp.eq.s32.totalorder %s16, 1
    %p90 = por %p88, %p89
    %p91 = scmp.ne.s32.totalorder %s82, %s83
    %p92 = scmp.eq.s32.totalorder %s16, 0
    %p93 = por %p91, %p92
    %p94 = scmp.ne.s32.totalorder %s82, %s83
    %p95 = scmp.eq.s32.totalorder %s17, 1
    %p96 = por %p94, %p95
    %p98 = scmp.ne.s32.totalorder %s83, %s97
    %p99 = scmp.eq.s32.totalorder %s17, 0
    %p100 = por %p98, %p99
    %s102 = sadd.s32 %s101, 1
    %p105 = scmp.eq.s32.totalorder %s11, 1
    %p106 = scmp.ne.s32.totalorder %s101, %s103
    %p107 = scmp.eq.s32.totalorder %s11, 0
    %p108 = por %p106, %p107
    %p109 = scmp.ne.s32.totalorder %s101, %s103
    %p110 = scmp.eq.s32.totalorder %s16, 1
    %p111 = por %p109, %p110
    %p112 = scmp.ne.s32.totalorder %s103, %s104
    %p113 = scmp.eq.s32.totalorder %s16, 0
    %p114 = por %p112, %p113
    %p115 = scmp.ne.s32.totalorder %s103, %s104
    %p116 = scmp.eq.s32.totalorder %s17, 1
    %p117 = por %p115, %p116
    %p119 = scmp.ne.s32.totalorder %s104, %s118
    %p120 = scmp.eq.s32.totalorder %s17, 0
    %p121 = por %p119, %p120
    %s123 = sadd.s32 %s122, 1
    %p126 = scmp.eq.s32.totalorder %s11, 1
    %p127 = scmp.ne.s32.totalorder %s122, %s124
    %p128 = scmp.eq.s32.totalorder %s11, 0
    %p129 = por %p127, %p128
    %p130 = scmp.ne.s32.totalorder %s122, %s124
    %p131 = scmp.eq.s32.totalorder %s16, 1
    %p132 = por %p130, %p131
    %p133 = scmp.ne.s32.totalorder %s124, %s125
    %p134 = scmp.eq.s32.totalorder %s16, 0
    %p135 = por %p133, %p134
    %p136 = scmp.ne.s32.totalorder %s124, %s125
    %p137 = scmp.eq.s32.totalorder %s17, 1
    %p138 = por %p136, %p137
    %p140 = scmp.ne.s32.totalorder %s125, %s139
    %p141 = scmp.eq.s32.totalorder %s17, 0
    %p142 = por %p140, %p141
    %s143 = ssub.s32 %s18, %s30
    %s144 = ssub.s32 %s19, %s26
    %s145 = sor.u32 %s143, %s144
    %p146 = scmp.eq.s32.totalorder %s145, 0
    %s148 = sadd.s32 %s147, 1
    %s149 = scalar_select %p146, %s147, %s148
    %p152 = pneg %p146
    %p153 = scmp.eq.s32.totalorder %s11, 1
    %p154 = por %p152, %p153
    %p155 = scmp.ne.s32.totalorder %s147, %s150
    %p156 = scmp.eq.s32.totalorder %s11, 0
    %p157 = por %p155, %p156
    %p158 = scmp.ne.s32.totalorder %s147, %s150
    %p159 = scmp.eq.s32.totalorder %s16, 1
    %p160 = por %p158, %p159
    %p161 = scmp.ne.s32.totalorder %s150, %s151
    %p162 = scmp.eq.s32.totalorder %s16, 0
    %p163 = por %p161, %p162
    %p164 = scmp.ne.s32.totalorder %s150, %s151
    %p165 = scmp.eq.s32.totalorder %s17, 1
    %p166 = por %p164, %p165
    %p168 = scmp.ne.s32.totalorder %s151, %s167
    %p169 = scmp.eq.s32.totalorder %s17, 0
    %p170 = por %p168, %p169
    %p171 = scmp.le.s32.totalorder 1, %s11
    %p172 = scmp.lt.s32.totalorder %s11, 3
    %p173 = pnand %p171, %p172
    %p174 = pneg %p173
    // Predicated region
    $region9: #{key_encoder_forward.1} parent=5 // pred_check
      _
    $region10: #{key_encoder_forward.1} parent=5 // pred_check_branch
      %176 = sbr.rel (%p173) target = $region12
    $region11: #{key_encoder_forward.1} parent=5 // pred_region
      %s177 = ssub.s32 %s11, 1
      // Predicated region
      $region13: #{key_encoder_forward.1} parent=11 // pred_check
        %p178 = pneg %p72
      $region14: #{key_encoder_forward.1} parent=11 // pred_check_branch
        %180 = sbr.rel (%p178) target = $region16
      $region15: #{key_encoder_forward.1} parent=11 // pred_region
        _
      $region16: #{key_encoder_forward.1} parent=11 // pred_fallthru
        _
      // Predicated region
      $region17: #{key_encoder_forward.1} parent=11 // pred_check
        %p181 = pneg %p93
      $region18: #{key_encoder_forward.1} parent=11 // pred_check_branch
        %183 = sbr.rel (%p181) target = $region20
      $region19: #{key_encoder_forward.1} parent=11 // pred_region
        _
      $region20: #{key_encoder_forward.1} parent=11 // pred_fallthru
        _
      // Predicated region
      $region21: #{key_encoder_forward.1} parent=11 // pred_check
        %p184 = pneg %p114
      $region22: #{key_encoder_forward.1} parent=11 // pred_check_branch
        %186 = sbr.rel (%p184) target = $region24
      $region23: #{key_encoder_forward.1} parent=11 // pred_region
        _
      $region24: #{key_encoder_forward.1} parent=11 // pred_fallthru
        _
      // Predicated region
      $region25: #{key_encoder_forward.1} parent=11 // pred_check
        %p187 = pneg %p135
      $region26: #{key_encoder_forward.1} parent=11 // pred_check_branch
        %189 = sbr.rel (%p187) target = $region28
      $region27: #{key_encoder_forward.1} parent=11 // pred_region
        _
      $region28: #{key_encoder_forward.1} parent=11 // pred_fallthru
        _
    $region12: #{key_encoder_forward.1} parent=5 // pred_fallthru
      _
    %p190 = scmp.lt.s32.totalorder %s11, 2
    // Predicated region
    $region29: #{key_encoder_forward.1} parent=5 // pred_check
      %p191 = pneg %p190
    $region30: #{key_encoder_forward.1} parent=5 // pred_check_branch
      %193 = sbr.rel (%p191) target = $region32
    $region31: #{key_encoder_forward.1} parent=5 // pred_region
      // Predicated region
      $region33: #{key_encoder_forward.1} parent=31 // pred_check
        %p194 = pneg %p45
      $region34: #{key_encoder_forward.1} parent=31 // pred_check_branch
        %196 = sbr.rel (%p194) target = $region36
      $region35: #{key_encoder_forward.1} parent=31 // pred_region
        %s197 = smul.u32 2, %s19
        %p198 = scmp.lt.s32.totalorder %s18, 1
        %s199 = scalar_select %p198, %s18, 1
        %p200 = scmp.lt.s32.totalorder %s197, 1
        %s201 = scalar_select %p200, %s197, 1
        %s202 = smul.addr %s199, 4
        %s203 = sadd.s32 %s201, %s202
        %s204 = smul.addr %s203, 8
        %s205 = scalar_lea.vmem %s0, %s204
        %s206 = smul.u32 2, %s19
      $region36: #{key_encoder_forward.1} parent=31 // pred_fallthru
        _
    $region32: #{key_encoder_forward.1} parent=5 // pred_fallthru
      _
    %p207 = scmp.le.s32.totalorder 1, %s11
    %p208 = scmp.lt.s32.totalorder %s11, 3
    %p209 = pnand %p207, %p208
    %p210 = pneg %p209
    // Predicated region
    $region37: #{key_encoder_forward.1} parent=5 // pred_check
      _
    $region38: #{key_encoder_forward.1} parent=5 // pred_check_branch
      %212 = sbr.rel (%p209) target = $region40
    $region39: #{key_encoder_forward.1} parent=5 // pred_region
      %s213 = ssub.s32 %s11, 1
      %s214 = smul.u32 2, %s21
      %p215 = scmp.lt.s32.totalorder %s20, 1
      %s216 = scalar_select %p215, %s20, 1
      %p217 = scmp.lt.s32.totalorder %s214, 1
      %s218 = scalar_select %p217, %s214, 1
      %s219 = smul.addr %s216, 4
      %s220 = sadd.s32 %s218, %s219
      %s221 = smul.addr %s220, 8
      %s222 = scalar_lea.vmem %s0, %s221
      %p223 = pneg %p51
      %p224 = pneg %p48
      %p225 = pneg %p72
      %p226 = pneg %p69
      %p227 = pneg %p93
      %p228 = pneg %p90
      %p229 = pneg %p114
      %p230 = pneg %p111
      %p231 = pneg %p135
      %p232 = pneg %p132
      %p233 = pneg %p163
      %p234 = pneg %p160
      %s235 = smul.u32 2, %s21
      %p236 = scmp.lt.s32.totalorder %s20, 1
      %s237 = scalar_select %p236, %s20, 1
      %p238 = scmp.lt.s32.totalorder %s235, 1
      %s239 = scalar_select %p238, %s235, 1
      %s240 = smul.addr %s237, 16
      %s241 = sadd.s32 %s239, %s240
      %s242 = smul.addr %s241, 4
      %s243 = scalar_lea.vmem %s5, %s242
      %s244 = smul.u32 2, %s21
      %p245 = scmp.lt.s32.totalorder %s20, 1
      %s246 = scalar_select %p245, %s20, 1
      %p247 = scmp.lt.s32.totalorder %s244, 1
      %s248 = scalar_select %p247, %s244, 1
      %s249 = smul.addr %s246, 4
      %s250 = sadd.s32 %s248, %s249
      %s251 = smul.addr %s250, 8
      %s252 = scalar_lea.vmem %s0, %s251
      %s253 = smul.u32 2, %s21
      %s254 = smul.u32 2, %s21
      %p255 = scmp.lt.s32.totalorder %s20, 1
      %s256 = scalar_select %p255, %s20, 1
      %p257 = scmp.lt.s32.totalorder %s254, 1
      %s258 = scalar_select %p257, %s254, 1
      %s259 = smul.addr %s256, 16
      %s260 = sadd.s32 %s258, %s259
      %s261 = smul.addr %s260, 4
      %s262 = scalar_lea.vmem %s5, %s261
      %s263 = smul.u32 2, %s21
      %v265 = vld [vmem:[%s252] sm:$0xff]
      %v266 = vld [vmem:[%s252 + $0x8] sm:$0xff]
      %v267 = vld [vmem:[%s252 + $0x10] sm:$0xff]
      %v268 = vld [vmem:[%s252 + $0x18] sm:$0xff]
      %v269 = vpack.c.bf16 %v267, %v265
      %v270 = vpack.c.bf16 %v268, %v266
      %v271 = vld [vmem:[%s1] sm:$0xf]
      %v272 = vld [vmem:[%s1 + $0x4] sm:$0xf]
      %v273 = vld [vmem:[%s1 + $0x8] sm:$0xf]
      %v274 = vld [vmem:[%s1 + $0xc] sm:$0xf]
      %v275 = vld [vmem:[%s1 + $0x10] sm:$0xf]
      %v276 = vld [vmem:[%s1 + $0x14] sm:$0xf]
      %v277 = vld [vmem:[%s1 + $0x18] sm:$0xf]
      %v278 = vld [vmem:[%s1 + $0x1c] sm:$0xf]
      %v279 = vld [vmem:[%s1 + $0x20] sm:$0xf]
      %v280 = vld [vmem:[%s1 + $0x24] sm:$0xf]
      %v281 = vld [vmem:[%s1 + $0x28] sm:$0xf]
      %v282 = vld [vmem:[%s1 + $0x2c] sm:$0xf]
      %v283 = vld [vmem:[%s1 + $0x30] sm:$0xf]
      %v284 = vld [vmem:[%s1 + $0x34] sm:$0xf]
      %v285 = vld [vmem:[%s1 + $0x38] sm:$0xf]
      %v286 = vld [vmem:[%s1 + $0x3c] sm:$0xf]
      %v287 = vld [vmem:[%s2] sm:$0xff]
      %v288 = vld [vmem:[%s2 + $0x8] sm:$0xff]
      %v289 = vld [vmem:[%s2 + $0x10] sm:$0xff]
      %v290 = vld [vmem:[%s2 + $0x18] sm:$0xff]
      %v291 = vld [vmem:[%s2 + $0x20] sm:$0xff]
      %v292 = vld [vmem:[%s2 + $0x28] sm:$0xff]
      %v293 = vld [vmem:[%s2 + $0x30] sm:$0xff]
      %v294 = vld [vmem:[%s2 + $0x38] sm:$0xff]
      %v295 = vld [vmem:[%s2 + $0x40] sm:$0xff]
      %v296 = vld [vmem:[%s2 + $0x48] sm:$0xff]
      %v297 = vld [vmem:[%s2 + $0x50] sm:$0xff]
      %v298 = vld [vmem:[%s2 + $0x58] sm:$0xff]
      %v299 = vld [vmem:[%s2 + $0x60] sm:$0xff]
      %v300 = vld [vmem:[%s2 + $0x68] sm:$0xff]
      %v301 = vld [vmem:[%s2 + $0x70] sm:$0xff]
      %v302 = vld [vmem:[%s2 + $0x78] sm:$0xff]
      %304 = vset.pattern.permute.xlu0 0
      %305 = vperm.xlu0 %304, %v287
      %v306 = vpop.permute.xlu0 %305
      %309 = vset.pattern.permute.xlu0 0
      %310 = vperm.xlu0 %309, %v288
      %v311 = vpop.permute.xlu0 %310
      %314 = vset.pattern.permute.xlu0 0
      %315 = vperm.xlu0 %314, %v289
      %v316 = vpop.permute.xlu0 %315
      %319 = vset.pattern.permute.xlu0 0
      %320 = vperm.xlu0 %319, %v290
      %v321 = vpop.permute.xlu0 %320
      %324 = vset.pattern.permute.xlu0 0
      %325 = vperm.xlu0 %324, %v291
      %v326 = vpop.permute.xlu0 %325
      %329 = vset.pattern.permute.xlu0 0
      %330 = vperm.xlu0 %329, %v292
      %v331 = vpop.permute.xlu0 %330
      %334 = vset.pattern.permute.xlu0 0
      %335 = vperm.xlu0 %334, %v293
      %v336 = vpop.permute.xlu0 %335
      %339 = vset.pattern.permute.xlu0 0
      %340 = vperm.xlu0 %339, %v294
      %v341 = vpop.permute.xlu0 %340
      %344 = vset.pattern.permute.xlu0 0
      %345 = vperm.xlu0 %344, %v295
      %v346 = vpop.permute.xlu0 %345
      %349 = vset.pattern.permute.xlu0 0
      %350 = vperm.xlu0 %349, %v296
      %v351 = vpop.permute.xlu0 %350
      %354 = vset.pattern.permute.xlu0 0
      %355 = vperm.xlu0 %354, %v297
      %v356 = vpop.permute.xlu0 %355
      %359 = vset.pattern.permute.xlu0 0
      %360 = vperm.xlu0 %359, %v298
      %v361 = vpop.permute.xlu0 %360
      %364 = vset.pattern.permute.xlu0 0
      %365 = vperm.xlu0 %364, %v299
      %v366 = vpop.permute.xlu0 %365
      %369 = vset.pattern.permute.xlu0 0
      %370 = vperm.xlu0 %369, %v300
      %v371 = vpop.permute.xlu0 %370
      %374 = vset.pattern.permute.xlu0 0
      %375 = vperm.xlu0 %374, %v301
      %v376 = vpop.permute.xlu0 %375
      %379 = vset.pattern.permute.xlu0 0
      %380 = vperm.xlu0 %379, %v302
      %v381 = vpop.permute.xlu0 %380
      %v399 = vunpack.c.l.b16 %v271
      %v400 = vunpack.c.l.b16 %v272
      %v401 = vunpack.c.l.b16 %v273
      %v402 = vunpack.c.l.b16 %v274
      %v403 = vunpack.c.l.b16 %v275
      %v404 = vunpack.c.l.b16 %v276
      %v405 = vunpack.c.l.b16 %v277
      %v406 = vunpack.c.l.b16 %v278
      %v407 = vunpack.c.l.b16 %v279
      %v408 = vunpack.c.l.b16 %v280
      %v409 = vunpack.c.l.b16 %v281
      %v410 = vunpack.c.l.b16 %v282
      %v411 = vunpack.c.l.b16 %v283
      %v412 = vunpack.c.l.b16 %v284
      %v413 = vunpack.c.l.b16 %v285
      %v414 = vunpack.c.l.b16 %v286
      %v415 = vpack.c.b16 %v400, %v399
      %v416 = vpack.c.b16 %v402, %v401
      %v417 = vpack.c.b16 %v404, %v403
      %v418 = vpack.c.b16 %v406, %v405
      %v419 = vpack.c.b16 %v408, %v407
      %v420 = vpack.c.b16 %v410, %v409
      %v421 = vpack.c.b16 %v412, %v411
      %v422 = vpack.c.b16 %v414, %v413
      %vm423 = vcmask 130048
      %v425 = vsel %vm423, %v415, 0
      %v428 = vsel %vm423, %v416, 0
      %v431 = vsel %vm423, %v417, 0
      %v434 = vsel %vm423, %v418, 0
      %v437 = vsel %vm423, %v419, 0
      %v440 = vsel %vm423, %v420, 0
      %v443 = vsel %vm423, %v421, 0
      %v446 = vsel %vm423, %v422, 0
      %448 = vmatprep.subr.bf16.mxu0 %v270
      %449 = vmatpush1.bf16.msra.mxu0 %v269
      %450 = vmatprep.subr.bf16.mxu0 0
      %451 = vmatpush1.bf16.msra.mxu0 0
      %452 = vmatprep.subr.bf16.mxu0 0
      %453 = vmatpush1.bf16.msra.mxu0 0
      %454 = vmatprep.subr.bf16.mxu0 0
      %455 = vmatpush1.bf16.msra.mxu0 0
      %456 = vmatprep.subr.bf16.mxu0 0
      %457 = vmatpush1.bf16.msra.mxu0 0
      %458 = vmatprep.subr.bf16.mxu0 0
      %459 = vmatpush1.bf16.msra.mxu0 0
      %460 = vmatprep.subr.bf16.mxu0 0
      %461 = vmatpush1.bf16.msra.mxu0 0
      %462 = vmatprep.subr.bf16.mxu0 0
      %463 = vmatpush1.bf16.msra.mxu0 0
      %464 = vmatprep.subr.bf16.mxu0 0
      %465 = vmatpush1.bf16.msra.mxu0 0
      %466 = vmatprep.subr.bf16.mxu0 0
      %467 = vmatpush1.bf16.msra.mxu0 0
      %468 = vmatprep.subr.bf16.mxu0 0
      %469 = vmatpush1.bf16.msra.mxu0 0
      %470 = vmatprep.subr.bf16.mxu0 0
      %471 = vmatpush1.bf16.msra.mxu0 0
      %472 = vmatprep.subr.bf16.mxu0 0
      %473 = vmatpush1.bf16.msra.mxu0 0
      %474 = vmatprep.subr.bf16.mxu0 0
      %475 = vmatpush1.bf16.msra.mxu0 0
      %476 = vmatprep.subr.bf16.mxu0 0
      %477 = vmatpush1.bf16.msra.mxu0 0
      %478 = vmatprep.subr.bf16.mxu0 0
      %479 = vmatpush1.bf16.msra.mxu0 0
      %480 = vmatprep.mubr.bf16.mxu0 0
      %481 = vmatmul.mubr.bf16.gmra.mrb[0].mxu0 %v425
      %v482 = vpop.f32.mrb[0].mxu0
      %v483 = vadd.f32 %v306, %v482
      %v484 = vpop.f32.mrb[0].mxu0
      %v485 = vadd.f32 %v306, %v484
      %v486 = vpop.f32.mrb[0].mxu0
      %v487 = vadd.f32 %v311, %v486
      %v488 = vpop.f32.mrb[0].mxu0
      %v489 = vadd.f32 %v311, %v488
      %490 = vmatprep.mubr.bf16.mxu0 0
      %491 = vmatmul.mubr.bf16.gmra.mrb[0].mxu0 %v428
      %v492 = vpop.f32.mrb[0].mxu0
      %v493 = vadd.f32 %v316, %v492
      %v494 = vpop.f32.mrb[0].mxu0
      %v495 = vadd.f32 %v316, %v494
      %v496 = vpop.f32.mrb[0].mxu0
      %v497 = vadd.f32 %v321, %v496
      %v498 = vpop.f32.mrb[0].mxu0
      %v499 = vadd.f32 %v321, %v498
      %500 = vmatprep.mubr.bf16.mxu0 0
      %501 = vmatmul.mubr.bf16.gmra.mrb[0].mxu0 %v431
      %v502 = vpop.f32.mrb[0].mxu0
      %v503 = vadd.f32 %v326, %v502
      %v504 = vpop.f32.mrb[0].mxu0
      %v505 = vadd.f32 %v326, %v504
      %v506 = vpop.f32.mrb[0].mxu0
      %v507 = vadd.f32 %v331, %v506
      %v508 = vpop.f32.mrb[0].mxu0
      %v509 = vadd.f32 %v331, %v508
      %510 = vmatprep.mubr.bf16.mxu0 0
      %511 = vmatmul.mubr.bf16.gmra.mrb[0].mxu0 %v434
      %v512 = vpop.f32.mrb[0].mxu0
      %v513 = vadd.f32 %v336, %v512
      %v514 = vpop.f32.mrb[0].mxu0
      %v515 = vadd.f32 %v336, %v514
      %v516 = vpop.f32.mrb[0].mxu0
      %v517 = vadd.f32 %v341, %v516
      %v518 = vpop.f32.mrb[0].mxu0
      %v519 = vadd.f32 %v341, %v518
      %520 = vmatprep.mubr.bf16.mxu0 0
      %521 = vmatmul.mubr.bf16.gmra.mrb[0].mxu0 %v437
      %v522 = vpop.f32.mrb[0].mxu0
      %v523 = vadd.f32 %v346, %v522
      %v524 = vpop.f32.mrb[0].mxu0
      %v525 = vadd.f32 %v346, %v524
      %v526 = vpop.f32.mrb[0].mxu0
      %v527 = vadd.f32 %v351, %v526
      %v528 = vpop.f32.mrb[0].mxu0
      %v529 = vadd.f32 %v351, %v528
      %530 = vmatprep.mubr.bf16.mxu0 0
      %531 = vmatmul.mubr.bf16.gmra.mrb[0].mxu0 %v440
      %v532 = vpop.f32.mrb[0].mxu0
      %v533 = vadd.f32 %v356, %v532
      %v534 = vpop.f32.mrb[0].mxu0
      %v535 = vadd.f32 %v356, %v534
      %v536 = vpop.f32.mrb[0].mxu0
      %v537 = vadd.f32 %v361, %v536
      %v538 = vpop.f32.mrb[0].mxu0
      %v539 = vadd.f32 %v361, %v538
      %540 = vmatprep.mubr.bf16.mxu0 0
      %541 = vmatmul.mubr.bf16.gmra.mrb[0].mxu0 %v443
      %v542 = vpop.f32.mrb[0].mxu0
      %v543 = vadd.f32 %v366, %v542
      %v544 = vpop.f32.mrb[0].mxu0
      %v545 = vadd.f32 %v366, %v544
      %v546 = vpop.f32.mrb[0].mxu0
      %v547 = vadd.f32 %v371, %v546
      %v548 = vpop.f32.mrb[0].mxu0
      %v549 = vadd.f32 %v371, %v548
      %550 = vmatprep.mubr.bf16.mxu0 0
      %551 = vmatmul.mubr.bf16.gmra.mrb[0].mxu0 %v446
      %v552 = vpop.f32.mrb[0].mxu0
      %v553 = vadd.f32 %v376, %v552
      %v554 = vpop.f32.mrb[0].mxu0
      %v555 = vadd.f32 %v376, %v554
      %v556 = vpop.f32.mrb[0].mxu0
      %v557 = vadd.f32 %v381, %v556
      %v558 = vpop.f32.mrb[0].mxu0
      %v559 = vadd.f32 %v381, %v558
      %560 = vdwg.mxu0
      %v561 = vmax.f32 %v483, 0.0
      %v562 = vmax.f32 %v485, 0.0
      %v563 = vmax.f32 %v487, 0.0
      %v564 = vmax.f32 %v489, 0.0
      %v565 = vmax.f32 %v493, 0.0
      %v566 = vmax.f32 %v495, 0.0
      %v567 = vmax.f32 %v497, 0.0
      %v568 = vmax.f32 %v499, 0.0
      %v569 = vmax.f32 %v503, 0.0
      %v570 = vmax.f32 %v505, 0.0
      %v571 = vmax.f32 %v507, 0.0
      %v572 = vmax.f32 %v509, 0.0
      %v573 = vmax.f32 %v513, 0.0
      %v574 = vmax.f32 %v515, 0.0
      %v575 = vmax.f32 %v517, 0.0
      %v576 = vmax.f32 %v519, 0.0
      %v577 = vmax.f32 %v523, 0.0
      %v578 = vmax.f32 %v525, 0.0
      %v579 = vmax.f32 %v527, 0.0
      %v580 = vmax.f32 %v529, 0.0
      %v581 = vmax.f32 %v533, 0.0
      %v582 = vmax.f32 %v535, 0.0
      %v583 = vmax.f32 %v537, 0.0
      %v584 = vmax.f32 %v539, 0.0
      %v585 = vmax.f32 %v543, 0.0
      %v586 = vmax.f32 %v545, 0.0
      %v587 = vmax.f32 %v547, 0.0
      %v588 = vmax.f32 %v549, 0.0
      %v589 = vmax.f32 %v553, 0.0
      %v590 = vmax.f32 %v555, 0.0
      %v591 = vmax.f32 %v557, 0.0
      %v592 = vmax.f32 %v559, 0.0
      %v593 = vpack.c.bf16 %v563, %v561
      %v594 = vpack.c.bf16 %v564, %v562
      %v595 = vpack.c.bf16 %v567, %v565
      %v596 = vpack.c.bf16 %v568, %v566
      %v597 = vpack.c.bf16 %v571, %v569
      %v598 = vpack.c.bf16 %v572, %v570
      %v599 = vpack.c.bf16 %v575, %v573
      %v600 = vpack.c.bf16 %v576, %v574
      %v601 = vpack.c.bf16 %v579, %v577
      %v602 = vpack.c.bf16 %v580, %v578
      %v603 = vpack.c.bf16 %v583, %v581
      %v604 = vpack.c.bf16 %v584, %v582
      %v605 = vpack.c.bf16 %v587, %v585
      %v606 = vpack.c.bf16 %v588, %v586
      %v607 = vpack.c.bf16 %v591, %v589
      %v608 = vpack.c.bf16 %v592, %v590
      %v609 = vld [vmem:[%s3] sm:$0xf]
      %v610 = vld [vmem:[%s3 + $0x10] sm:$0xf]
      %v611 = vld [vmem:[%s3 + $0x20] sm:$0xf]
      %v612 = vld [vmem:[%s3 + $0x30] sm:$0xf]
      %v613 = vld [vmem:[%s3 + $0x40] sm:$0xf]
      %v614 = vld [vmem:[%s3 + $0x50] sm:$0xf]
      %v615 = vld [vmem:[%s3 + $0x60] sm:$0xf]
      %v616 = vld [vmem:[%s3 + $0x70] sm:$0xf]
      %v617 = vld [vmem:[%s1 + $0x40] sm:$0xf]
      %v618 = vld [vmem:[%s1 + $0x44] sm:$0xf]
      %v619 = vld [vmem:[%s1 + $0x48] sm:$0xf]
      %v620 = vld [vmem:[%s1 + $0x4c] sm:$0xf]
      %v621 = vld [vmem:[%s1 + $0x50] sm:$0xf]
      %v622 = vld [vmem:[%s1 + $0x54] sm:$0xf]
      %v623 = vld [vmem:[%s1 + $0x58] sm:$0xf]
      %v624 = vld [vmem:[%s1 + $0x5c] sm:$0xf]
      %v625 = vld [vmem:[%s1 + $0x60] sm:$0xf]
      %v626 = vld [vmem:[%s1 + $0x64] sm:$0xf]
      %v627 = vld [vmem:[%s1 + $0x68] sm:$0xf]
      %v628 = vld [vmem:[%s1 + $0x6c] sm:$0xf]
      %v629 = vld [vmem:[%s1 + $0x70] sm:$0xf]
      %v630 = vld [vmem:[%s1 + $0x74] sm:$0xf]
      %v631 = vld [vmem:[%s1 + $0x78] sm:$0xf]
      %v632 = vld [vmem:[%s1 + $0x7c] sm:$0xf]
      %v633 = vld [vmem:[%s2 + $0x80] sm:$0xff]
      %v634 = vld [vmem:[%s2 + $0x88] sm:$0xff]
      %v635 = vld [vmem:[%s2 + $0x90] sm:$0xff]
      %v636 = vld [vmem:[%s2 + $0x98] sm:$0xff]
      %v637 = vld [vmem:[%s2 + $0xa0] sm:$0xff]
      %v638 = vld [vmem:[%s2 + $0xa8] sm:$0xff]
      %v639 = vld [vmem:[%s2 + $0xb0] sm:$0xff]
      %v640 = vld [vmem:[%s2 + $0xb8] sm:$0xff]
      %v641 = vld [vmem:[%s2 + $0xc0] sm:$0xff]
      %v642 = vld [vmem:[%s2 + $0xc8] sm:$0xff]
      %v643 = vld [vmem:[%s2 + $0xd0] sm:$0xff]
      %v644 = vld [vmem:[%s2 + $0xd8] sm:$0xff]
      %v645 = vld [vmem:[%s2 + $0xe0] sm:$0xff]
      %v646 = vld [vmem:[%s2 + $0xe8] sm:$0xff]
      %v647 = vld [vmem:[%s2 + $0xf0] sm:$0xff]
      %v648 = vld [vmem:[%s2 + $0xf8] sm:$0xff]
      %650 = vset.pattern.permute.xlu0 0
      %651 = vperm.xlu0 %650, %v633
      %v652 = vpop.permute.xlu0 %651
      %655 = vset.pattern.permute.xlu0 0
      %656 = vperm.xlu0 %655, %v634
      %v657 = vpop.permute.xlu0 %656
      %660 = vset.pattern.permute.xlu0 0
      %661 = vperm.xlu0 %660, %v635
      %v662 = vpop.permute.xlu0 %661
      %665 = vset.pattern.permute.xlu0 0
      %666 = vperm.xlu0 %665, %v636
      %v667 = vpop.permute.xlu0 %666
      %670 = vset.pattern.permute.xlu0 0
      %671 = vperm.xlu0 %670, %v637
      %v672 = vpop.permute.xlu0 %671
      %675 = vset.pattern.permute.xlu0 0
      %676 = vperm.xlu0 %675, %v638
      %v677 = vpop.permute.xlu0 %676
      %680 = vset.pattern.permute.xlu0 0
      %681 = vperm.xlu0 %680, %v639
      %v682 = vpop.permute.xlu0 %681
      %685 = vset.pattern.permute.xlu0 0
      %686 = vperm.xlu0 %685, %v640
      %v687 = vpop.permute.xlu0 %686
      %690 = vset.pattern.permute.xlu0 0
      %691 = vperm.xlu0 %690, %v641
      %v692 = vpop.permute.xlu0 %691
      %695 = vset.pattern.permute.xlu0 0
      %696 = vperm.xlu0 %695, %v642
      %v697 = vpop.permute.xlu0 %696
      %700 = vset.pattern.permute.xlu0 0
      %701 = vperm.xlu0 %700, %v643
      %v702 = vpop.permute.xlu0 %701
      %705 = vset.pattern.permute.xlu0 0
      %706 = vperm.xlu0 %705, %v644
      %v707 = vpop.permute.xlu0 %706
      %710 = vset.pattern.permute.xlu0 0
      %711 = vperm.xlu0 %710, %v645
      %v712 = vpop.permute.xlu0 %711
      %715 = vset.pattern.permute.xlu0 0
      %716 = vperm.xlu0 %715, %v646
      %v717 = vpop.permute.xlu0 %716
      %720 = vset.pattern.permute.xlu0 0
      %721 = vperm.xlu0 %720, %v647
      %v722 = vpop.permute.xlu0 %721
      %725 = vset.pattern.permute.xlu0 0
      %726 = vperm.xlu0 %725, %v648
      %v727 = vpop.permute.xlu0 %726
      %v745 = vunpack.c.l.b16 %v617
      %v746 = vunpack.c.l.b16 %v618
      %v747 = vunpack.c.l.b16 %v619
      %v748 = vunpack.c.l.b16 %v620
      %v749 = vunpack.c.l.b16 %v621
      %v750 = vunpack.c.l.b16 %v622
      %v751 = vunpack.c.l.b16 %v623
      %v752 = vunpack.c.l.b16 %v624
      %v753 = vunpack.c.l.b16 %v625
      %v754 = vunpack.c.l.b16 %v626
      %v755 = vunpack.c.l.b16 %v627
      %v756 = vunpack.c.l.b16 %v628
      %v757 = vunpack.c.l.b16 %v629
      %v758 = vunpack.c.l.b16 %v630
      %v759 = vunpack.c.l.b16 %v631
      %v760 = vunpack.c.l.b16 %v632
      %v761 = vpack.c.b16 %v746, %v745
      %v762 = vpack.c.b16 %v748, %v747
      %v763 = vpack.c.b16 %v750, %v749
      %v764 = vpack.c.b16 %v752, %v751
      %v765 = vpack.c.b16 %v754, %v753
      %v766 = vpack.c.b16 %v756, %v755
      %v767 = vpack.c.b16 %v758, %v757
      %v768 = vpack.c.b16 %v760, %v759
      %v770 = vsel %vm423, %v761, 0
      %v773 = vsel %vm423, %v762, 0
      %v776 = vsel %vm423, %v763, 0
      %v779 = vsel %vm423, %v764, 0
      %v782 = vsel %vm423, %v765, 0
      %v785 = vsel %vm423, %v766, 0
      %v788 = vsel %vm423, %v767, 0
      %v791 = vsel %vm423, %v768, 0
      %793 = vmatprep.subr.bf16.mxu0 %v270
      %794 = vmatpush1.bf16.msra.mxu0 %v269
      %795 = vmatprep.subr.bf16.mxu0 0
      %796 = vmatpush1.bf16.msra.mxu0 0
      %797 = vmatprep.subr.bf16.mxu0 0
      %798 = vmatpush1.bf16.msra.mxu0 0
      %799 = vmatprep.subr.bf16.mxu0 0
      %800 = vmatpush1.bf16.msra.mxu0 0
      %801 = vmatprep.subr.bf16.mxu0 0
      %802 = vmatpush1.bf16.msra.mxu0 0
      %803 = vmatprep.subr.bf16.mxu0 0
      %804 = vmatpush1.bf16.msra.mxu0 0
      %805 = vmatprep.subr.bf16.mxu0 0
      %806 = vmatpush1.bf16.msra.mxu0 0
      %807 = vmatprep.subr.bf16.mxu0 0
      %808 = vmatpush1.bf16.msra.mxu0 0
      %809 = vmatprep.subr.bf16.mxu0 0
      %810 = vmatpush1.bf16.msra.mxu0 0
      %811 = vmatprep.subr.bf16.mxu0 0
      %812 = vmatpush1.bf16.msra.mxu0 0
      %813 = vmatprep.subr.bf16.mxu0 0
      %814 = vmatpush1.bf16.msra.mxu0 0
      %815 = vmatprep.subr.bf16.mxu0 0
      %816 = vmatpush1.bf16.msra.mxu0 0
      %817 = vmatprep.subr.bf16.mxu0 0
      %818 = vmatpush1.bf16.msra.mxu0 0
      %819 = vmatprep.subr.bf16.mxu0 0
      %820 = vmatpush1.bf16.msra.mxu0 0
      %821 = vmatprep.subr.bf16.mxu0 0
      %822 = vmatpush1.bf16.msra.mxu0 0
      %823 = vmatprep.subr.bf16.mxu0 0
      %824 = vmatpush1.bf16.msra.mxu0 0
      %825 = vmatprep.mubr.bf16.mxu0 0
      %826 = vmatmul.mubr.bf16.gmra.mrb[0].mxu0 %v770
      %v827 = vpop.f32.mrb[0].mxu0
      %v828 = vadd.f32 %v652, %v827
      %v829 = vpop.f32.mrb[0].mxu0
      %v830 = vadd.f32 %v652, %v829
      %v831 = vpop.f32.mrb[0].mxu0
      %v832 = vadd.f32 %v657, %v831
      %v833 = vpop.f32.mrb[0].mxu0
      %v834 = vadd.f32 %v657, %v833
      %835 = vmatprep.mubr.bf16.mxu0 0
      %836 = vmatmul.mubr.bf16.gmra.mrb[0].mxu0 %v773
      %v837 = vpop.f32.mrb[0].mxu0
      %v838 = vadd.f32 %v662, %v837
      %v839 = vpop.f32.mrb[0].mxu0
      %v840 = vadd.f32 %v662, %v839
      %v841 = vpop.f32.mrb[0].mxu0
      %v842 = vadd.f32 %v667, %v841
      %v843 = vpop.f32.mrb[0].mxu0
      %v844 = vadd.f32 %v667, %v843
      %845 = vmatprep.mubr.bf16.mxu0 0
      %846 = vmatmul.mubr.bf16.gmra.mrb[0].mxu0 %v776
      %v847 = vpop.f32.mrb[0].mxu0
      %v848 = vadd.f32 %v672, %v847
      %v849 = vpop.f32.mrb[0].mxu0
      %v850 = vadd.f32 %v672, %v849
      %v851 = vpop.f32.mrb[0].mxu0
      %v852 = vadd.f32 %v677, %v851
      %v853 = vpop.f32.mrb[0].mxu0
      %v854 = vadd.f32 %v677, %v853
      %855 = vmatprep.mubr.bf16.mxu0 0
      %856 = vmatmul.mubr.bf16.gmra.mrb[0].mxu0 %v779
      %v857 = vpop.f32.mrb[0].mxu0
      %v858 = vadd.f32 %v682, %v857
      %v859 = vpop.f32.mrb[0].mxu0
      %v860 = vadd.f32 %v682, %v859
      %v861 = vpop.f32.mrb[0].mxu0
      %v862 = vadd.f32 %v687, %v861
      %v863 = vpop.f32.mrb[0].mxu0
      %v864 = vadd.f32 %v687, %v863
      %865 = vmatprep.mubr.bf16.mxu0 0
      %866 = vmatmul.mubr.bf16.gmra.mrb[0].mxu0 %v782
      %v867 = vpop.f32.mrb[0].mxu0
      %v868 = vadd.f32 %v692, %v867
      %v869 = vpop.f32.mrb[0].mxu0
      %v870 = vadd.f32 %v692, %v869
      %v871 = vpop.f32.mrb[0].mxu0
      %v872 = vadd.f32 %v697, %v871
      %v873 = vpop.f32.mrb[0].mxu0
      %v874 = vadd.f32 %v697, %v873
      %875 = vmatprep.mubr.bf16.mxu0 0
      %876 = vmatmul.mubr.bf16.gmra.mrb[0].mxu0 %v785
      %v877 = vpop.f32.mrb[0].mxu0
      %v878 = vadd.f32 %v702, %v877
      %v879 = vpop.f32.mrb[0].mxu0
      %v880 = vadd.f32 %v702, %v879
      %v881 = vpop.f32.mrb[0].mxu0
      %v882 = vadd.f32 %v707, %v881
      %v883 = vpop.f32.mrb[0].mxu0
      %v884 = vadd.f32 %v707, %v883
      %885 = vmatprep.mubr.bf16.mxu0 0
      %886 = vmatmul.mubr.bf16.gmra.mrb[0].mxu0 %v788
      %v887 = vpop.f32.mrb[0].mxu0
      %v888 = vadd.f32 %v712, %v887
      %v889 = vpop.f32.mrb[0].mxu0
      %v890 = vadd.f32 %v712, %v889
      %v891 = vpop.f32.mrb[0].mxu0
      %v892 = vadd.f32 %v717, %v891
      %v893 = vpop.f32.mrb[0].mxu0
      %v894 = vadd.f32 %v717, %v893
      %895 = vmatprep.mubr.bf16.mxu0 0
      %896 = vmatmul.mubr.bf16.gmra.mrb[0].mxu0 %v791
      %v897 = vpop.f32.mrb[0].mxu0
      %v898 = vadd.f32 %v722, %v897
      %v899 = vpop.f32.mrb[0].mxu0
      %v900 = vadd.f32 %v722, %v899
      %v901 = vpop.f32.mrb[0].mxu0
      %v902 = vadd.f32 %v727, %v901
      %v903 = vpop.f32.mrb[0].mxu0
      %v904 = vadd.f32 %v727, %v903
      %905 = vdwg.mxu0
      %v906 = vmax.f32 %v828, 0.0
      %v907 = vmax.f32 %v830, 0.0
      %v908 = vmax.f32 %v832, 0.0
      %v909 = vmax.f32 %v834, 0.0
      %v910 = vmax.f32 %v838, 0.0
      %v911 = vmax.f32 %v840, 0.0
      %v912 = vmax.f32 %v842, 0.0
      %v913 = vmax.f32 %v844, 0.0
      %v914 = vmax.f32 %v848, 0.0
      %v915 = vmax.f32 %v850, 0.0
      %v916 = vmax.f32 %v852, 0.0
      %v917 = vmax.f32 %v854, 0.0
      %v918 = vmax.f32 %v858, 0.0
      %v919 = vmax.f32 %v860, 0.0
      %v920 = vmax.f32 %v862, 0.0
      %v921 = vmax.f32 %v864, 0.0
      %v922 = vmax.f32 %v868, 0.0
      %v923 = vmax.f32 %v870, 0.0
      %v924 = vmax.f32 %v872, 0.0
      %v925 = vmax.f32 %v874, 0.0
      %v926 = vmax.f32 %v878, 0.0
      %v927 = vmax.f32 %v880, 0.0
      %v928 = vmax.f32 %v882, 0.0
      %v929 = vmax.f32 %v884, 0.0
      %v930 = vmax.f32 %v888, 0.0
      %v931 = vmax.f32 %v890, 0.0
      %v932 = vmax.f32 %v892, 0.0
      %v933 = vmax.f32 %v894, 0.0
      %v934 = vmax.f32 %v898, 0.0
      %v935 = vmax.f32 %v900, 0.0
      %v936 = vmax.f32 %v902, 0.0
      %v937 = vmax.f32 %v904, 0.0
      %v938 = vpack.c.bf16 %v908, %v906
      %v939 = vpack.c.bf16 %v909, %v907
      %v940 = vpack.c.bf16 %v912, %v910
      %v941 = vpack.c.bf16 %v913, %v911
      %v942 = vpack.c.bf16 %v916, %v914
      %v943 = vpack.c.bf16 %v917, %v915
      %v944 = vpack.c.bf16 %v920, %v918
      %v945 = vpack.c.bf16 %v921, %v919
      %v946 = vpack.c.bf16 %v924, %v922
      %v947 = vpack.c.bf16 %v925, %v923
      %v948 = vpack.c.bf16 %v928, %v926
      %v949 = vpack.c.bf16 %v929, %v927
      %v950 = vpack.c.bf16 %v932, %v930
      %v951 = vpack.c.bf16 %v933, %v931
      %v952 = vpack.c.bf16 %v936, %v934
      %v953 = vpack.c.bf16 %v937, %v935
      %v954 = vld [vmem:[%s3 + $0x4] sm:$0xf]
      %v955 = vld [vmem:[%s3 + $0x14] sm:$0xf]
      %v956 = vld [vmem:[%s3 + $0x24] sm:$0xf]
      %v957 = vld [vmem:[%s3 + $0x34] sm:$0xf]
      %v958 = vld [vmem:[%s3 + $0x44] sm:$0xf]
      %v959 = vld [vmem:[%s3 + $0x54] sm:$0xf]
      %v960 = vld [vmem:[%s3 + $0x64] sm:$0xf]
      %v961 = vld [vmem:[%s3 + $0x74] sm:$0xf]
      %v970 = vunpack.c.l.b16 %v954
      %v971 = vunpack.c.l.b16 %v955
      %v972 = vunpack.c.l.b16 %v956
      %v973 = vunpack.c.l.b16 %v957
      %v974 = vunpack.c.l.b16 %v958
      %v975 = vunpack.c.l.b16 %v959
      %v976 = vunpack.c.l.b16 %v960
      %v977 = vunpack.c.l.b16 %v961
      %v978 = vpack.c.b16 %v971, %v970
      %v979 = vpack.c.b16 %v973, %v972
      %v980 = vpack.c.b16 %v975, %v974
      %v981 = vpack.c.b16 %v977, %v976
      %986 = vmatprep.subr.bf16.mxu0 %v939
      %987 = vmatpush1.bf16.msra.mxu0 %v938
      %988 = vmatprep.subr.bf16.mxu0 %v941
      %989 = vmatpush1.bf16.msra.mxu0 %v940
      %990 = vmatprep.subr.bf16.mxu0 %v943
      %991 = vmatpush1.bf16.msra.mxu0 %v942
      %992 = vmatprep.subr.bf16.mxu0 %v945
      %993 = vmatpush1.bf16.msra.mxu0 %v944
      %994 = vmatprep.subr.bf16.mxu0 %v947
      %995 = vmatpush1.bf16.msra.mxu0 %v946
      %996 = vmatprep.subr.bf16.mxu0 %v949
      %997 = vmatpush1.bf16.msra.mxu0 %v948
      %998 = vmatprep.subr.bf16.mxu0 %v951
      %999 = vmatpush1.bf16.msra.mxu0 %v950
      %1000 = vmatprep.subr.bf16.mxu0 %v953
      %1001 = vmatpush1.bf16.msra.mxu0 %v952
      %1002 = vmatprep.subr.bf16.mxu0 0
      %1003 = vmatpush1.bf16.msra.mxu0 0
      %1004 = vmatprep.subr.bf16.mxu0 0
      %1005 = vmatpush1.bf16.msra.mxu0 0
      %1006 = vmatprep.subr.bf16.mxu0 0
      %1007 = vmatpush1.bf16.msra.mxu0 0
      %1008 = vmatprep.subr.bf16.mxu0 0
      %1009 = vmatpush1.bf16.msra.mxu0 0
      %1010 = vmatprep.subr.bf16.mxu0 0
      %1011 = vmatpush1.bf16.msra.mxu0 0
      %1012 = vmatprep.subr.bf16.mxu0 0
      %1013 = vmatpush1.bf16.msra.mxu0 0
      %1014 = vmatprep.subr.bf16.mxu0 0
      %1015 = vmatpush1.bf16.msra.mxu0 0
      %1016 = vmatprep.subr.bf16.mxu0 0
      %1017 = vmatpush1.bf16.msra.mxu0 0
      %1018 = vmatprep.mubr.bf16.mxu0 0
      %1019 = vmatmul.mubr.bf16.gmra.mrb[0].mxu0 %v978
      %v1020 = vpop.f32.mrb[0].mxu0
      %v1021 = vadd.f32 0.0, %v1020
      %v1022 = vpop.f32.mrb[0].mxu0
      %v1023 = vadd.f32 0.0, %v1022
      %v1024 = vpop.f32.mrb[0].mxu0
      %v1025 = vadd.f32 0.0, %v1024
      %v1026 = vpop.f32.mrb[0].mxu0
      %v1027 = vadd.f32 0.0, %v1026
      %1028 = vmatprep.mubr.bf16.mxu0 0
      %1029 = vmatmul.mubr.bf16.gmra.mrb[0].mxu0 %v979
      %v1030 = vpop.f32.mrb[0].mxu0
      %v1031 = vadd.f32 0.0, %v1030
      %v1032 = vpop.f32.mrb[0].mxu0
      %v1033 = vadd.f32 0.0, %v1032
      %v1034 = vpop.f32.mrb[0].mxu0
      %v1035 = vadd.f32 0.0, %v1034
      %v1036 = vpop.f32.mrb[0].mxu0
      %v1037 = vadd.f32 0.0, %v1036
      %1038 = vmatprep.mubr.bf16.mxu0 0
      %1039 = vmatmul.mubr.bf16.gmra.mrb[0].mxu0 %v980
      %v1040 = vpop.f32.mrb[0].mxu0
      %v1041 = vadd.f32 0.0, %v1040
      %v1042 = vpop.f32.mrb[0].mxu0
      %v1043 = vadd.f32 0.0, %v1042
      %v1044 = vpop.f32.mrb[0].mxu0
      %v1045 = vadd.f32 0.0, %v1044
      %v1046 = vpop.f32.mrb[0].mxu0
      %v1047 = vadd.f32 0.0, %v1046
      %1048 = vmatprep.mubr.bf16.mxu0 0
      %1049 = vmatmul.mubr.bf16.gmra.mrb[0].mxu0 %v981
      %v1050 = vpop.f32.mrb[0].mxu0
      %v1051 = vadd.f32 0.0, %v1050
      %v1052 = vpop.f32.mrb[0].mxu0
      %v1053 = vadd.f32 0.0, %v1052
      %v1054 = vpop.f32.mrb[0].mxu0
      %v1055 = vadd.f32 0.0, %v1054
      %v1056 = vpop.f32.mrb[0].mxu0
      %v1057 = vadd.f32 0.0, %v1056
      %1058 = vdwg.mxu0
      %v1067 = vunpack.c.l.b16 %v609
      %v1068 = vunpack.c.l.b16 %v610
      %v1069 = vunpack.c.l.b16 %v611
      %v1070 = vunpack.c.l.b16 %v612
      %v1071 = vunpack.c.l.b16 %v613
      %v1072 = vunpack.c.l.b16 %v614
      %v1073 = vunpack.c.l.b16 %v615
      %v1074 = vunpack.c.l.b16 %v616
      %v1075 = vpack.c.b16 %v1068, %v1067
      %v1076 = vpack.c.b16 %v1070, %v1069
      %v1077 = vpack.c.b16 %v1072, %v1071
      %v1078 = vpack.c.b16 %v1074, %v1073
      %1083 = vmatprep.subr.bf16.mxu0 %v594
      %1084 = vmatpush1.bf16.msra.mxu0 %v593
      %1085 = vmatprep.subr.bf16.mxu0 %v596
      %1086 = vmatpush1.bf16.msra.mxu0 %v595
      %1087 = vmatprep.subr.bf16.mxu0 %v598
      %1088 = vmatpush1.bf16.msra.mxu0 %v597
      %1089 = vmatprep.subr.bf16.mxu0 %v600
      %1090 = vmatpush1.bf16.msra.mxu0 %v599
      %1091 = vmatprep.subr.bf16.mxu0 %v602
      %1092 = vmatpush1.bf16.msra.mxu0 %v601
      %1093 = vmatprep.subr.bf16.mxu0 %v604
      %1094 = vmatpush1.bf16.msra.mxu0 %v603
      %1095 = vmatprep.subr.bf16.mxu0 %v606
      %1096 = vmatpush1.bf16.msra.mxu0 %v605
      %1097 = vmatprep.subr.bf16.mxu0 %v608
      %1098 = vmatpush1.bf16.msra.mxu0 %v607
      %1099 = vmatprep.subr.bf16.mxu0 0
      %1100 = vmatpush1.bf16.msra.mxu0 0
      %1101 = vmatprep.subr.bf16.mxu0 0
      %1102 = vmatpush1.bf16.msra.mxu0 0
      %1103 = vmatprep.subr.bf16.mxu0 0
      %1104 = vmatpush1.bf16.msra.mxu0 0
      %1105 = vmatprep.subr.bf16.mxu0 0
      %1106 = vmatpush1.bf16.msra.mxu0 0
      %1107 = vmatprep.subr.bf16.mxu0 0
      %1108 = vmatpush1.bf16.msra.mxu0 0
      %1109 = vmatprep.subr.bf16.mxu0 0
      %1110 = vmatpush1.bf16.msra.mxu0 0
      %1111 = vmatprep.subr.bf16.mxu0 0
      %1112 = vmatpush1.bf16.msra.mxu0 0
      %1113 = vmatprep.subr.bf16.mxu0 0
      %1114 = vmatpush1.bf16.msra.mxu0 0
      %1115 = vmatprep.mubr.bf16.mxu0 0
      %1116 = vmatmul.mubr.bf16.gmra.mrb[0].mxu0 %v1075
      %v1117 = vpop.f32.mrb[0].mxu0
      %v1118 = vadd.f32 %v1021, %v1117
      %v1119 = vpop.f32.mrb[0].mxu0
      %v1120 = vadd.f32 %v1023, %v1119
      %v1121 = vpop.f32.mrb[0].mxu0
      %v1122 = vadd.f32 %v1025, %v1121
      %v1123 = vpop.f32.mrb[0].mxu0
      %v1124 = vadd.f32 %v1027, %v1123
      %1125 = vmatprep.mubr.bf16.mxu0 0
      %1126 = vmatmul.mubr.bf16.gmra.mrb[0].mxu0 %v1076
      %v1127 = vpop.f32.mrb[0].mxu0
      %v1128 = vadd.f32 %v1031, %v1127
      %v1129 = vpop.f32.mrb[0].mxu0
      %v1130 = vadd.f32 %v1033, %v1129
      %v1131 = vpop.f32.mrb[0].mxu0
      %v1132 = vadd.f32 %v1035, %v1131
      %v1133 = vpop.f32.mrb[0].mxu0
      %v1134 = vadd.f32 %v1037, %v1133
      %1135 = vmatprep.mubr.bf16.mxu0 0
      %1136 = vmatmul.mubr.bf16.gmra.mrb[0].mxu0 %v1077
      %v1137 = vpop.f32.mrb[0].mxu0
      %v1138 = vadd.f32 %v1041, %v1137
      %v1139 = vpop.f32.mrb[0].mxu0
      %v1140 = vadd.f32 %v1043, %v1139
      %v1141 = vpop.f32.mrb[0].mxu0
      %v1142 = vadd.f32 %v1045, %v1141
      %v1143 = vpop.f32.mrb[0].mxu0
      %v1144 = vadd.f32 %v1047, %v1143
      %1145 = vmatprep.mubr.bf16.mxu0 0
      %1146 = vmatmul.mubr.bf16.gmra.mrb[0].mxu0 %v1078
      %v1147 = vpop.f32.mrb[0].mxu0
      %v1148 = vadd.f32 %v1051, %v1147
      %v1149 = vpop.f32.mrb[0].mxu0
      %v1150 = vadd.f32 %v1053, %v1149
      %v1151 = vpop.f32.mrb[0].mxu0
      %v1152 = vadd.f32 %v1055, %v1151
      %v1153 = vpop.f32.mrb[0].mxu0
      %v1154 = vadd.f32 %v1057, %v1153
      %1155 = vdwg.mxu0
      %v1156 = vld [vmem:[%s1 + $0x80] sm:$0xf]
      %v1157 = vld [vmem:[%s1 + $0x84] sm:$0xf]
      %v1158 = vld [vmem:[%s1 + $0x88] sm:$0xf]
      %v1159 = vld [vmem:[%s1 + $0x8c] sm:$0xf]
      %v1160 = vld [vmem:[%s1 + $0x90] sm:$0xf]
      %v1161 = vld [vmem:[%s1 + $0x94] sm:$0xf]
      %v1162 = vld [vmem:[%s1 + $0x98] sm:$0xf]
      %v1163 = vld [vmem:[%s1 + $0x9c] sm:$0xf]
      %v1164 = vld [vmem:[%s1 + $0xa0] sm:$0xf]
      %v1165 = vld [vmem:[%s1 + $0xa4] sm:$0xf]
      %v1166 = vld [vmem:[%s1 + $0xa8] sm:$0xf]
      %v1167 = vld [vmem:[%s1 + $0xac] sm:$0xf]
      %v1168 = vld [vmem:[%s1 + $0xb0] sm:$0xf]
      %v1169 = vld [vmem:[%s1 + $0xb4] sm:$0xf]
      %v1170 = vld [vmem:[%s1 + $0xb8] sm:$0xf]
      %v1171 = vld [vmem:[%s1 + $0xbc] sm:$0xf]
      %v1172 = vld [vmem:[%s2 + $0x100] sm:$0xff]
      %v1173 = vld [vmem:[%s2 + $0x108] sm:$0xff]
      %v1174 = vld [vmem:[%s2 + $0x110] sm:$0xff]
      %v1175 = vld [vmem:[%s2 + $0x118] sm:$0xff]
      %v1176 = vld [vmem:[%s2 + $0x120] sm:$0xff]
      %v1177 = vld [vmem:[%s2 + $0x128] sm:$0xff]
      %v1178 = vld [vmem:[%s2 + $0x130] sm:$0xff]
      %v1179 = vld [vmem:[%s2 + $0x138] sm:$0xff]
      %v1180 = vld [vmem:[%s2 + $0x140] sm:$0xff]
      %v1181 = vld [vmem:[%s2 + $0x148] sm:$0xff]
      %v1182 = vld [vmem:[%s2 + $0x150] sm:$0xff]
      %v1183 = vld [vmem:[%s2 + $0x158] sm:$0xff]
      %v1184 = vld [vmem:[%s2 + $0x160] sm:$0xff]
      %v1185 = vld [vmem:[%s2 + $0x168] sm:$0xff]
      %v1186 = vld [vmem:[%s2 + $0x170] sm:$0xff]
      %v1187 = vld [vmem:[%s2 + $0x178] sm:$0xff]
      %1189 = vset.pattern.permute.xlu0 0
      %1190 = vperm.xlu0 %1189, %v1172
      %v1191 = vpop.permute.xlu0 %1190
      %1194 = vset.pattern.permute.xlu0 0
      %1195 = vperm.xlu0 %1194, %v1173
      %v1196 = vpop.permute.xlu0 %1195
      %1199 = vset.pattern.permute.xlu0 0
      %1200 = vperm.xlu0 %1199, %v1174
      %v1201 = vpop.permute.xlu0 %1200
      %1204 = vset.pattern.permute.xlu0 0
      %1205 = vperm.xlu0 %1204, %v1175
      %v1206 = vpop.permute.xlu0 %1205
      %1209 = vset.pattern.permute.xlu0 0
      %1210 = vperm.xlu0 %1209, %v1176
      %v1211 = vpop.permute.xlu0 %1210
      %1214 = vset.pattern.permute.xlu0 0
      %1215 = vperm.xlu0 %1214, %v1177
      %v1216 = vpop.permute.xlu0 %1215
      %1219 = vset.pattern.permute.xlu0 0
      %1220 = vperm.xlu0 %1219, %v1178
      %v1221 = vpop.permute.xlu0 %1220
      %1224 = vset.pattern.permute.xlu0 0
      %1225 = vperm.xlu0 %1224, %v1179
      %v1226 = vpop.permute.xlu0 %1225
      %1229 = vset.pattern.permute.xlu0 0
      %1230 = vperm.xlu0 %1229, %v1180
      %v1231 = vpop.permute.xlu0 %1230
      %1234 = vset.pattern.permute.xlu0 0
      %1235 = vperm.xlu0 %1234, %v1181
      %v1236 = vpop.permute.xlu0 %1235
      %1239 = vset.pattern.permute.xlu0 0
      %1240 = vperm.xlu0 %1239, %v1182
      %v1241 = vpop.permute.xlu0 %1240
      %1244 = vset.pattern.permute.xlu0 0
      %1245 = vperm.xlu0 %1244, %v1183
      %v1246 = vpop.permute.xlu0 %1245
      %1249 = vset.pattern.permute.xlu0 0
      %1250 = vperm.xlu0 %1249, %v1184
      %v1251 = vpop.permute.xlu0 %1250
      %1254 = vset.pattern.permute.xlu0 0
      %1255 = vperm.xlu0 %1254, %v1185
      %v1256 = vpop.permute.xlu0 %1255
      %1259 = vset.pattern.permute.xlu0 0
      %1260 = vperm.xlu0 %1259, %v1186
      %v1261 = vpop.permute.xlu0 %1260
      %1264 = vset.pattern.permute.xlu0 0
      %1265 = vperm.xlu0 %1264, %v1187
      %v1266 = vpop.permute.xlu0 %1265
      %v1284 = vunpack.c.l.b16 %v1156
      %v1285 = vunpack.c.l.b16 %v1157
      %v1286 = vunpack.c.l.b16 %v1158
      %v1287 = vunpack.c.l.b16 %v1159
      %v1288 = vunpack.c.l.b16 %v1160
      %v1289 = vunpack.c.l.b16 %v1161
      %v1290 = vunpack.c.l.b16 %v1162
      %v1291 = vunpack.c.l.b16 %v1163
      %v1292 = vunpack.c.l.b16 %v1164
      %v1293 = vunpack.c.l.b16 %v1165
      %v1294 = vunpack.c.l.b16 %v1166
      %v1295 = vunpack.c.l.b16 %v1167
      %v1296 = vunpack.c.l.b16 %v1168
      %v1297 = vunpack.c.l.b16 %v1169
      %v1298 = vunpack.c.l.b16 %v1170
      %v1299 = vunpack.c.l.b16 %v1171
      %v1300 = vpack.c.b16 %v1285, %v1284
      %v1301 = vpack.c.b16 %v1287, %v1286
      %v1302 = vpack.c.b16 %v1289, %v1288
      %v1303 = vpack.c.b16 %v1291, %v1290
      %v1304 = vpack.c.b16 %v1293, %v1292
      %v1305 = vpack.c.b16 %v1295, %v1294
      %v1306 = vpack.c.b16 %v1297, %v1296
      %v1307 = vpack.c.b16 %v1299, %v1298
      %v1309 = vsel %vm423, %v1300, 0
      %v1312 = vsel %vm423, %v1301, 0
      %v1315 = vsel %vm423, %v1302, 0
      %v1318 = vsel %vm423, %v1303, 0
      %v1321 = vsel %vm423, %v1304, 0
      %v1324 = vsel %vm423, %v1305, 0
      %v1327 = vsel %vm423, %v1306, 0
      %v1330 = vsel %vm423, %v1307, 0
      %1332 = vmatprep.subr.bf16.mxu0 %v270
      %1333 = vmatpush1.bf16.msra.mxu0 %v269
      %1334 = vmatprep.subr.bf16.mxu0 0
      %1335 = vmatpush1.bf16.msra.mxu0 0
      %1336 = vmatprep.subr.bf16.mxu0 0
      %1337 = vmatpush1.bf16.msra.mxu0 0
      %1338 = vmatprep.subr.bf16.mxu0 0
      %1339 = vmatpush1.bf16.msra.mxu0 0
      %1340 = vmatprep.subr.bf16.mxu0 0
      %1341 = vmatpush1.bf16.msra.mxu0 0
      %1342 = vmatprep.subr.bf16.mxu0 0
      %1343 = vmatpush1.bf16.msra.mxu0 0
      %1344 = vmatprep.subr.bf16.mxu0 0
      %1345 = vmatpush1.bf16.msra.mxu0 0
      %1346 = vmatprep.subr.bf16.mxu0 0
      %1347 = vmatpush1.bf16.msra.mxu0 0
      %1348 = vmatprep.subr.bf16.mxu0 0
      %1349 = vmatpush1.bf16.msra.mxu0 0
      %1350 = vmatprep.subr.bf16.mxu0 0
      %1351 = vmatpush1.bf16.msra.mxu0 0
      %1352 = vmatprep.subr.bf16.mxu0 0
      %1353 = vmatpush1.bf16.msra.mxu0 0
      %1354 = vmatprep.subr.bf16.mxu0 0
      %1355 = vmatpush1.bf16.msra.mxu0 0
      %1356 = vmatprep.subr.bf16.mxu0 0
      %1357 = vmatpush1.bf16.msra.mxu0 0
      %1358 = vmatprep.subr.bf16.mxu0 0
      %1359 = vmatpush1.bf16.msra.mxu0 0
      %1360 = vmatprep.subr.bf16.mxu0 0
      %1361 = vmatpush1.bf16.msra.mxu0 0
      %1362 = vmatprep.subr.bf16.mxu0 0
      %1363 = vmatpush1.bf16.msra.mxu0 0
      %1364 = vmatprep.mubr.bf16.mxu0 0
      %1365 = vmatmul.mubr.bf16.gmra.mrb[0].mxu0 %v1309
      %v1366 = vpop.f32.mrb[0].mxu0
      %v1367 = vadd.f32 %v1191, %v1366
      %v1368 = vpop.f32.mrb[0].mxu0
      %v1369 = vadd.f32 %v1191, %v1368
      %v1370 = vpop.f32.mrb[0].mxu0
      %v1371 = vadd.f32 %v1196, %v1370
      %v1372 = vpop.f32.mrb[0].mxu0
      %v1373 = vadd.f32 %v1196, %v1372
      %1374 = vmatprep.mubr.bf16.mxu0 0
      %1375 = vmatmul.mubr.bf16.gmra.mrb[0].mxu0 %v1312
      %v1376 = vpop.f32.mrb[0].mxu0
      %v1377 = vadd.f32 %v1201, %v1376
      %v1378 = vpop.f32.mrb[0].mxu0
      %v1379 = vadd.f32 %v1201, %v1378
      %v1380 = vpop.f32.mrb[0].mxu0
      %v1381 = vadd.f32 %v1206, %v1380
      %v1382 = vpop.f32.mrb[0].mxu0
      %v1383 = vadd.f32 %v1206, %v1382
      %1384 = vmatprep.mubr.bf16.mxu0 0
      %1385 = vmatmul.mubr.bf16.gmra.mrb[0].mxu0 %v1315
      %v1386 = vpop.f32.mrb[0].mxu0
      %v1387 = vadd.f32 %v1211, %v1386
      %v1388 = vpop.f32.mrb[0].mxu0
      %v1389 = vadd.f32 %v1211, %v1388
      %v1390 = vpop.f32.mrb[0].mxu0
      %v1391 = vadd.f32 %v1216, %v1390
      %v1392 = vpop.f32.mrb[0].mxu0
      %v1393 = vadd.f32 %v1216, %v1392
      %1394 = vmatprep.mubr.bf16.mxu0 0
      %1395 = vmatmul.mubr.bf16.gmra.mrb[0].mxu0 %v1318
      %v1396 = vpop.f32.mrb[0].mxu0
      %v1397 = vadd.f32 %v1221, %v1396
      %v1398 = vpop.f32.mrb[0].mxu0
      %v1399 = vadd.f32 %v1221, %v1398
      %v1400 = vpop.f32.mrb[0].mxu0
      %v1401 = vadd.f32 %v1226, %v1400
      %v1402 = vpop.f32.mrb[0].mxu0
      %v1403 = vadd.f32 %v1226, %v1402
      %1404 = vmatprep.mubr.bf16.mxu0 0
      %1405 = vmatmul.mubr.bf16.gmra.mrb[0].mxu0 %v1321
      %v1406 = vpop.f32.mrb[0].mxu0
      %v1407 = vadd.f32 %v1231, %v1406
      %v1408 = vpop.f32.mrb[0].mxu0
      %v1409 = vadd.f32 %v1231, %v1408
      %v1410 = vpop.f32.mrb[0].mxu0
      %v1411 = vadd.f32 %v1236, %v1410
      %v1412 = vpop.f32.mrb[0].mxu0
      %v1413 = vadd.f32 %v1236, %v1412
      %1414 = vmatprep.mubr.bf16.mxu0 0
      %1415 = vmatmul.mubr.bf16.gmra.mrb[0].mxu0 %v1324
      %v1416 = vpop.f32.mrb[0].mxu0
      %v1417 = vadd.f32 %v1241, %v1416
      %v1418 = vpop.f32.mrb[0].mxu0
      %v1419 = vadd.f32 %v1241, %v1418
      %v1420 = vpop.f32.mrb[0].mxu0
      %v1421 = vadd.f32 %v1246, %v1420
      %v1422 = vpop.f32.mrb[0].mxu0
      %v1423 = vadd.f32 %v1246, %v1422
      %1424 = vmatprep.mubr.bf16.mxu0 0
      %1425 = vmatmul.mubr.bf16.gmra.mrb[0].mxu0 %v1327
      %v1426 = vpop.f32.mrb[0].mxu0
      %v1427 = vadd.f32 %v1251, %v1426
      %v1428 = vpop.f32.mrb[0].mxu0
      %v1429 = vadd.f32 %v1251, %v1428
      %v1430 = vpop.f32.mrb[0].mxu0
      %v1431 = vadd.f32 %v1256, %v1430
      %v1432 = vpop.f32.mrb[0].mxu0
      %v1433 = vadd.f32 %v1256, %v1432
      %1434 = vmatprep.mubr.bf16.mxu0 0
      %1435 = vmatmul.mubr.bf16.gmra.mrb[0].mxu0 %v1330
      %v1436 = vpop.f32.mrb[0].mxu0
      %v1437 = vadd.f32 %v1261, %v1436
      %v1438 = vpop.f32.mrb[0].mxu0
      %v1439 = vadd.f32 %v1261, %v1438
      %v1440 = vpop.f32.mrb[0].mxu0
      %v1441 = vadd.f32 %v1266, %v1440
      %v1442 = vpop.f32.mrb[0].mxu0
      %v1443 = vadd.f32 %v1266, %v1442
      %1444 = vdwg.mxu0
      %v1445 = vmax.f32 %v1367, 0.0
      %v1446 = vmax.f32 %v1369, 0.0
      %v1447 = vmax.f32 %v1371, 0.0
      %v1448 = vmax.f32 %v1373, 0.0
      %v1449 = vmax.f32 %v1377, 0.0
      %v1450 = vmax.f32 %v1379, 0.0
      %v1451 = vmax.f32 %v1381, 0.0
      %v1452 = vmax.f32 %v1383, 0.0
      %v1453 = vmax.f32 %v1387, 0.0
      %v1454 = vmax.f32 %v1389, 0.0
      %v1455 = vmax.f32 %v1391, 0.0
      %v1456 = vmax.f32 %v1393, 0.0
      %v1457 = vmax.f32 %v1397, 0.0
      %v1458 = vmax.f32 %v1399, 0.0
      %v1459 = vmax.f32 %v1401, 0.0
      %v1460 = vmax.f32 %v1403, 0.0
      %v1461 = vmax.f32 %v1407, 0.0
      %v1462 = vmax.f32 %v1409, 0.0
      %v1463 = vmax.f32 %v1411, 0.0
      %v1464 = vmax.f32 %v1413, 0.0
      %v1465 = vmax.f32 %v1417, 0.0
      %v1466 = vmax.f32 %v1419, 0.0
      %v1467 = vmax.f32 %v1421, 0.0
      %v1468 = vmax.f32 %v1423, 0.0
      %v1469 = vmax.f32 %v1427, 0.0
      %v1470 = vmax.f32 %v1429, 0.0
      %v1471 = vmax.f32 %v1431, 0.0
      %v1472 = vmax.f32 %v1433, 0.0
      %v1473 = vmax.f32 %v1437, 0.0
      %v1474 = vmax.f32 %v1439, 0.0
      %v1475 = vmax.f32 %v1441, 0.0
      %v1476 = vmax.f32 %v1443, 0.0
      %v1477 = vpack.c.bf16 %v1447, %v1445
      %v1478 = vpack.c.bf16 %v1448, %v1446
      %v1479 = vpack.c.bf16 %v1451, %v1449
      %v1480 = vpack.c.bf16 %v1452, %v1450
      %v1481 = vpack.c.bf16 %v1455, %v1453
      %v1482 = vpack.c.bf16 %v1456, %v1454
      %v1483 = vpack.c.bf16 %v1459, %v1457
      %v1484 = vpack.c.bf16 %v1460, %v1458
      %v1485 = vpack.c.bf16 %v1463, %v1461
      %v1486 = vpack.c.bf16 %v1464, %v1462
      %v1487 = vpack.c.bf16 %v1467, %v1465
      %v1488 = vpack.c.bf16 %v1468, %v1466
      %v1489 = vpack.c.bf16 %v1471, %v1469
      %v1490 = vpack.c.bf16 %v1472, %v1470
      %v1491 = vpack.c.bf16 %v1475, %v1473
      %v1492 = vpack.c.bf16 %v1476, %v1474
      %v1493 = vld [vmem:[%s3 + $0x8] sm:$0xf]
      %v1494 = vld [vmem:[%s3 + $0x18] sm:$0xf]
      %v1495 = vld [vmem:[%s3 + $0x28] sm:$0xf]
      %v1496 = vld [vmem:[%s3 + $0x38] sm:$0xf]
      %v1497 = vld [vmem:[%s3 + $0x48] sm:$0xf]
      %v1498 = vld [vmem:[%s3 + $0x58] sm:$0xf]
      %v1499 = vld [vmem:[%s3 + $0x68] sm:$0xf]
      %v1500 = vld [vmem:[%s3 + $0x78] sm:$0xf]
      %v1509 = vunpack.c.l.b16 %v1493
      %v1510 = vunpack.c.l.b16 %v1494
      %v1511 = vunpack.c.l.b16 %v1495
      %v1512 = vunpack.c.l.b16 %v1496
      %v1513 = vunpack.c.l.b16 %v1497
      %v1514 = vunpack.c.l.b16 %v1498
      %v1515 = vunpack.c.l.b16 %v1499
      %v1516 = vunpack.c.l.b16 %v1500
      %v1517 = vpack.c.b16 %v1510, %v1509
      %v1518 = vpack.c.b16 %v1512, %v1511
      %v1519 = vpack.c.b16 %v1514, %v1513
      %v1520 = vpack.c.b16 %v1516, %v1515
      %1525 = vmatprep.subr.bf16.mxu0 %v1478
      %1526 = vmatpush1.bf16.msra.mxu0 %v1477
      %1527 = vmatprep.subr.bf16.mxu0 %v1480
      %1528 = vmatpush1.bf16.msra.mxu0 %v1479
      %1529 = vmatprep.subr.bf16.mxu0 %v1482
      %1530 = vmatpush1.bf16.msra.mxu0 %v1481
      %1531 = vmatprep.subr.bf16.mxu0 %v1484
      %1532 = vmatpush1.bf16.msra.mxu0 %v1483
      %1533 = vmatprep.subr.bf16.mxu0 %v1486
      %1534 = vmatpush1.bf16.msra.mxu0 %v1485
      %1535 = vmatprep.subr.bf16.mxu0 %v1488
      %1536 = vmatpush1.bf16.msra.mxu0 %v1487
      %1537 = vmatprep.subr.bf16.mxu0 %v1490
      %1538 = vmatpush1.bf16.msra.mxu0 %v1489
      %1539 = vmatprep.subr.bf16.mxu0 %v1492
      %1540 = vmatpush1.bf16.msra.mxu0 %v1491
      %1541 = vmatprep.subr.bf16.mxu0 0
      %1542 = vmatpush1.bf16.msra.mxu0 0
      %1543 = vmatprep.subr.bf16.mxu0 0
      %1544 = vmatpush1.bf16.msra.mxu0 0
      %1545 = vmatprep.subr.bf16.mxu0 0
      %1546 = vmatpush1.bf16.msra.mxu0 0
      %1547 = vmatprep.subr.bf16.mxu0 0
      %1548 = vmatpush1.bf16.msra.mxu0 0
      %1549 = vmatprep.subr.bf16.mxu0 0
      %1550 = vmatpush1.bf16.msra.mxu0 0
      %1551 = vmatprep.subr.bf16.mxu0 0
      %1552 = vmatpush1.bf16.msra.mxu0 0
      %1553 = vmatprep.subr.bf16.mxu0 0
      %1554 = vmatpush1.bf16.msra.mxu0 0
      %1555 = vmatprep.subr.bf16.mxu0 0
      %1556 = vmatpush1.bf16.msra.mxu0 0
      %1557 = vmatprep.mubr.bf16.mxu0 0
      %1558 = vmatmul.mubr.bf16.gmra.mrb[0].mxu0 %v1517
      %v1559 = vpop.f32.mrb[0].mxu0
      %v1560 = vadd.f32 0.0, %v1559
      %v1561 = vpop.f32.mrb[0].mxu0
      %v1562 = vadd.f32 0.0, %v1561
      %v1563 = vpop.f32.mrb[0].mxu0
      %v1564 = vadd.f32 0.0, %v1563
      %v1565 = vpop.f32.mrb[0].mxu0
      %v1566 = vadd.f32 0.0, %v1565
      %1567 = vmatprep.mubr.bf16.mxu0 0
      %1568 = vmatmul.mubr.bf16.gmra.mrb[0].mxu0 %v1518
      %v1569 = vpop.f32.mrb[0].mxu0
      %v1570 = vadd.f32 0.0, %v1569
      %v1571 = vpop.f32.mrb[0].mxu0
      %v1572 = vadd.f32 0.0, %v1571
      %v1573 = vpop.f32.mrb[0].mxu0
      %v1574 = vadd.f32 0.0, %v1573
      %v1575 = vpop.f32.mrb[0].mxu0
      %v1576 = vadd.f32 0.0, %v1575
      %1577 = vmatprep.mubr.bf16.mxu0 0
      %1578 = vmatmul.mubr.bf16.gmra.mrb[0].mxu0 %v1519
      %v1579 = vpop.f32.mrb[0].mxu0
      %v1580 = vadd.f32 0.0, %v1579
      %v1581 = vpop.f32.mrb[0].mxu0
      %v1582 = vadd.f32 0.0, %v1581
      %v1583 = vpop.f32.mrb[0].mxu0
      %v1584 = vadd.f32 0.0, %v1583
      %v1585 = vpop.f32.mrb[0].mxu0
      %v1586 = vadd.f32 0.0, %v1585
      %1587 = vmatprep.mubr.bf16.mxu0 0
      %1588 = vmatmul.mubr.bf16.gmra.mrb[0].mxu0 %v1520
      %v1589 = vpop.f32.mrb[0].mxu0
      %v1590 = vadd.f32 0.0, %v1589
      %v1591 = vpop.f32.mrb[0].mxu0
      %v1592 = vadd.f32 0.0, %v1591
      %v1593 = vpop.f32.mrb[0].mxu0
      %v1594 = vadd.f32 0.0, %v1593
      %v1595 = vpop.f32.mrb[0].mxu0
      %v1596 = vadd.f32 0.0, %v1595
      %1597 = vdwg.mxu0
      %v1598 = vadd.f32 %v1118, %v1560
      %v1599 = vadd.f32 %v1120, %v1562
      %v1600 = vadd.f32 %v1122, %v1564
      %v1601 = vadd.f32 %v1124, %v1566
      %v1602 = vadd.f32 %v1128, %v1570
      %v1603 = vadd.f32 %v1130, %v1572
      %v1604 = vadd.f32 %v1132, %v1574
      %v1605 = vadd.f32 %v1134, %v1576
      %v1606 = vadd.f32 %v1138, %v1580
      %v1607 = vadd.f32 %v1140, %v1582
      %v1608 = vadd.f32 %v1142, %v1584
      %v1609 = vadd.f32 %v1144, %v1586
      %v1610 = vadd.f32 %v1148, %v1590
      %v1611 = vadd.f32 %v1150, %v1592
      %v1612 = vadd.f32 %v1152, %v1594
      %v1613 = vadd.f32 %v1154, %v1596
      %v1614 = vld [vmem:[%s1 + $0xc0] sm:$0xf]
      %v1615 = vld [vmem:[%s1 + $0xc4] sm:$0xf]
      %v1616 = vld [vmem:[%s1 + $0xc8] sm:$0xf]
      %v1617 = vld [vmem:[%s1 + $0xcc] sm:$0xf]
      %v1618 = vld [vmem:[%s1 + $0xd0] sm:$0xf]
      %v1619 = vld [vmem:[%s1 + $0xd4] sm:$0xf]
      %v1620 = vld [vmem:[%s1 + $0xd8] sm:$0xf]
      %v1621 = vld [vmem:[%s1 + $0xdc] sm:$0xf]
      %v1622 = vld [vmem:[%s1 + $0xe0] sm:$0xf]
      %v1623 = vld [vmem:[%s1 + $0xe4] sm:$0xf]
      %v1624 = vld [vmem:[%s1 + $0xe8] sm:$0xf]
      %v1625 = vld [vmem:[%s1 + $0xec] sm:$0xf]
      %v1626 = vld [vmem:[%s1 + $0xf0] sm:$0xf]
      %v1627 = vld [vmem:[%s1 + $0xf4] sm:$0xf]
      %v1628 = vld [vmem:[%s1 + $0xf8] sm:$0xf]
      %v1629 = vld [vmem:[%s1 + $0xfc] sm:$0xf]
      %v1630 = vld [vmem:[%s2 + $0x180] sm:$0xff]
      %v1631 = vld [vmem:[%s2 + $0x188] sm:$0xff]
      %v1632 = vld [vmem:[%s2 + $0x190] sm:$0xff]
      %v1633 = vld [vmem:[%s2 + $0x198] sm:$0xff]
      %v1634 = vld [vmem:[%s2 + $0x1a0] sm:$0xff]
      %v1635 = vld [vmem:[%s2 + $0x1a8] sm:$0xff]
      %v1636 = vld [vmem:[%s2 + $0x1b0] sm:$0xff]
      %v1637 = vld [vmem:[%s2 + $0x1b8] sm:$0xff]
      %v1638 = vld [vmem:[%s2 + $0x1c0] sm:$0xff]
      %v1639 = vld [vmem:[%s2 + $0x1c8] sm:$0xff]
      %v1640 = vld [vmem:[%s2 + $0x1d0] sm:$0xff]
      %v1641 = vld [vmem:[%s2 + $0x1d8] sm:$0xff]
      %v1642 = vld [vmem:[%s2 + $0x1e0] sm:$0xff]
      %v1643 = vld [vmem:[%s2 + $0x1e8] sm:$0xff]
      %v1644 = vld [vmem:[%s2 + $0x1f0] sm:$0xff]
      %v1645 = vld [vmem:[%s2 + $0x1f8] sm:$0xff]
      %1647 = vset.pattern.permute.xlu0 0
      %1648 = vperm.xlu0 %1647, %v1630
      %v1649 = vpop.permute.xlu0 %1648
      %1652 = vset.pattern.permute.xlu0 0
      %1653 = vperm.xlu0 %1652, %v1631
      %v1654 = vpop.permute.xlu0 %1653
      %1657 = vset.pattern.permute.xlu0 0
      %1658 = vperm.xlu0 %1657, %v1632
      %v1659 = vpop.permute.xlu0 %1658
      %1662 = vset.pattern.permute.xlu0 0
      %1663 = vperm.xlu0 %1662, %v1633
      %v1664 = vpop.permute.xlu0 %1663
      %1667 = vset.pattern.permute.xlu0 0
      %1668 = vperm.xlu0 %1667, %v1634
      %v1669 = vpop.permute.xlu0 %1668
      %1672 = vset.pattern.permute.xlu0 0
      %1673 = vperm.xlu0 %1672, %v1635
      %v1674 = vpop.permute.xlu0 %1673
      %1677 = vset.pattern.permute.xlu0 0
      %1678 = vperm.xlu0 %1677, %v1636
      %v1679 = vpop.permute.xlu0 %1678
      %1682 = vset.pattern.permute.xlu0 0
      %1683 = vperm.xlu0 %1682, %v1637
      %v1684 = vpop.permute.xlu0 %1683
      %1687 = vset.pattern.permute.xlu0 0
      %1688 = vperm.xlu0 %1687, %v1638
      %v1689 = vpop.permute.xlu0 %1688
      %1692 = vset.pattern.permute.xlu0 0
      %1693 = vperm.xlu0 %1692, %v1639
      %v1694 = vpop.permute.xlu0 %1693
      %1697 = vset.pattern.permute.xlu0 0
      %1698 = vperm.xlu0 %1697, %v1640
      %v1699 = vpop.permute.xlu0 %1698
      %1702 = vset.pattern.permute.xlu0 0
      %1703 = vperm.xlu0 %1702, %v1641
      %v1704 = vpop.permute.xlu0 %1703
      %1707 = vset.pattern.permute.xlu0 0
      %1708 = vperm.xlu0 %1707, %v1642
      %v1709 = vpop.permute.xlu0 %1708
      %1712 = vset.pattern.permute.xlu0 0
      %1713 = vperm.xlu0 %1712, %v1643
      %v1714 = vpop.permute.xlu0 %1713
      %1717 = vset.pattern.permute.xlu0 0
      %1718 = vperm.xlu0 %1717, %v1644
      %v1719 = vpop.permute.xlu0 %1718
      %1722 = vset.pattern.permute.xlu0 0
      %1723 = vperm.xlu0 %1722, %v1645
      %v1724 = vpop.permute.xlu0 %1723
      %v1742 = vunpack.c.l.b16 %v1614
      %v1743 = vunpack.c.l.b16 %v1615
      %v1744 = vunpack.c.l.b16 %v1616
      %v1745 = vunpack.c.l.b16 %v1617
      %v1746 = vunpack.c.l.b16 %v1618
      %v1747 = vunpack.c.l.b16 %v1619
      %v1748 = vunpack.c.l.b16 %v1620
      %v1749 = vunpack.c.l.b16 %v1621
      %v1750 = vunpack.c.l.b16 %v1622
      %v1751 = vunpack.c.l.b16 %v1623
      %v1752 = vunpack.c.l.b16 %v1624
      %v1753 = vunpack.c.l.b16 %v1625
      %v1754 = vunpack.c.l.b16 %v1626
      %v1755 = vunpack.c.l.b16 %v1627
      %v1756 = vunpack.c.l.b16 %v1628
      %v1757 = vunpack.c.l.b16 %v1629
      %v1758 = vpack.c.b16 %v1743, %v1742
      %v1759 = vpack.c.b16 %v1745, %v1744
      %v1760 = vpack.c.b16 %v1747, %v1746
      %v1761 = vpack.c.b16 %v1749, %v1748
      %v1762 = vpack.c.b16 %v1751, %v1750
      %v1763 = vpack.c.b16 %v1753, %v1752
      %v1764 = vpack.c.b16 %v1755, %v1754
      %v1765 = vpack.c.b16 %v1757, %v1756
      %v1767 = vsel %vm423, %v1758, 0
      %v1770 = vsel %vm423, %v1759, 0
      %v1773 = vsel %vm423, %v1760, 0
      %v1776 = vsel %vm423, %v1761, 0
      %v1779 = vsel %vm423, %v1762, 0
      %v1782 = vsel %vm423, %v1763, 0
      %v1785 = vsel %vm423, %v1764, 0
      %v1788 = vsel %vm423, %v1765, 0
      %1790 = vmatprep.subr.bf16.mxu0 %v270
      %1791 = vmatpush1.bf16.msra.mxu0 %v269
      %1792 = vmatprep.subr.bf16.mxu0 0
      %1793 = vmatpush1.bf16.msra.mxu0 0
      %1794 = vmatprep.subr.bf16.mxu0 0
      %1795 = vmatpush1.bf16.msra.mxu0 0
      %1796 = vmatprep.subr.bf16.mxu0 0
      %1797 = vmatpush1.bf16.msra.mxu0 0
      %1798 = vmatprep.subr.bf16.mxu0 0
      %1799 = vmatpush1.bf16.msra.mxu0 0
      %1800 = vmatprep.subr.bf16.mxu0 0
      %1801 = vmatpush1.bf16.msra.mxu0 0
      %1802 = vmatprep.subr.bf16.mxu0 0
      %1803 = vmatpush1.bf16.msra.mxu0 0
      %1804 = vmatprep.subr.bf16.mxu0 0
      %1805 = vmatpush1.bf16.msra.mxu0 0
      %1806 = vmatprep.subr.bf16.mxu0 0
      %1807 = vmatpush1.bf16.msra.mxu0 0
      %1808 = vmatprep.subr.bf16.mxu0 0
      %1809 = vmatpush1.bf16.msra.mxu0 0
      %1810 = vmatprep.subr.bf16.mxu0 0
      %1811 = vmatpush1.bf16.msra.mxu0 0
      %1812 = vmatprep.subr.bf16.mxu0 0
      %1813 = vmatpush1.bf16.msra.mxu0 0
      %1814 = vmatprep.subr.bf16.mxu0 0
      %1815 = vmatpush1.bf16.msra.mxu0 0
      %1816 = vmatprep.subr.bf16.mxu0 0
      %1817 = vmatpush1.bf16.msra.mxu0 0
      %1818 = vmatprep.subr.bf16.mxu0 0
      %1819 = vmatpush1.bf16.msra.mxu0 0
      %1820 = vmatprep.subr.bf16.mxu0 0
      %1821 = vmatpush1.bf16.msra.mxu0 0
      %1822 = vmatprep.mubr.bf16.mxu0 0
      %1823 = vmatmul.mubr.bf16.gmra.mrb[0].mxu0 %v1767
      %v1824 = vpop.f32.mrb[0].mxu0
      %v1825 = vadd.f32 %v1649, %v1824
      %v1826 = vpop.f32.mrb[0].mxu0
      %v1827 = vadd.f32 %v1649, %v1826
      %v1828 = vpop.f32.mrb[0].mxu0
      %v1829 = vadd.f32 %v1654, %v1828
      %v1830 = vpop.f32.mrb[0].mxu0
      %v1831 = vadd.f32 %v1654, %v1830
      %1832 = vmatprep.mubr.bf16.mxu0 0
      %1833 = vmatmul.mubr.bf16.gmra.mrb[0].mxu0 %v1770
      %v1834 = vpop.f32.mrb[0].mxu0
      %v1835 = vadd.f32 %v1659, %v1834
      %v1836 = vpop.f32.mrb[0].mxu0
      %v1837 = vadd.f32 %v1659, %v1836
      %v1838 = vpop.f32.mrb[0].mxu0
      %v1839 = vadd.f32 %v1664, %v1838
      %v1840 = vpop.f32.mrb[0].mxu0
      %v1841 = vadd.f32 %v1664, %v1840
      %1842 = vmatprep.mubr.bf16.mxu0 0
      %1843 = vmatmul.mubr.bf16.gmra.mrb[0].mxu0 %v1773
      %v1844 = vpop.f32.mrb[0].mxu0
      %v1845 = vadd.f32 %v1669, %v1844
      %v1846 = vpop.f32.mrb[0].mxu0
      %v1847 = vadd.f32 %v1669, %v1846
      %v1848 = vpop.f32.mrb[0].mxu0
      %v1849 = vadd.f32 %v1674, %v1848
      %v1850 = vpop.f32.mrb[0].mxu0
      %v1851 = vadd.f32 %v1674, %v1850
      %1852 = vmatprep.mubr.bf16.mxu0 0
      %1853 = vmatmul.mubr.bf16.gmra.mrb[0].mxu0 %v1776
      %v1854 = vpop.f32.mrb[0].mxu0
      %v1855 = vadd.f32 %v1679, %v1854
      %v1856 = vpop.f32.mrb[0].mxu0
      %v1857 = vadd.f32 %v1679, %v1856
      %v1858 = vpop.f32.mrb[0].mxu0
      %v1859 = vadd.f32 %v1684, %v1858
      %v1860 = vpop.f32.mrb[0].mxu0
      %v1861 = vadd.f32 %v1684, %v1860
      %1862 = vmatprep.mubr.bf16.mxu0 0
      %1863 = vmatmul.mubr.bf16.gmra.mrb[0].mxu0 %v1779
      %v1864 = vpop.f32.mrb[0].mxu0
      %v1865 = vadd.f32 %v1689, %v1864
      %v1866 = vpop.f32.mrb[0].mxu0
      %v1867 = vadd.f32 %v1689, %v1866
      %v1868 = vpop.f32.mrb[0].mxu0
      %v1869 = vadd.f32 %v1694, %v1868
      %v1870 = vpop.f32.mrb[0].mxu0
      %v1871 = vadd.f32 %v1694, %v1870
      %1872 = vmatprep.mubr.bf16.mxu0 0
      %1873 = vmatmul.mubr.bf16.gmra.mrb[0].mxu0 %v1782
      %v1874 = vpop.f32.mrb[0].mxu0
      %v1875 = vadd.f32 %v1699, %v1874
      %v1876 = vpop.f32.mrb[0].mxu0
      %v1877 = vadd.f32 %v1699, %v1876
      %v1878 = vpop.f32.mrb[0].mxu0
      %v1879 = vadd.f32 %v1704, %v1878
      %v1880 = vpop.f32.mrb[0].mxu0
      %v1881 = vadd.f32 %v1704, %v1880
      %1882 = vmatprep.mubr.bf16.mxu0 0
      %1883 = vmatmul.mubr.bf16.gmra.mrb[0].mxu0 %v1785
      %v1884 = vpop.f32.mrb[0].mxu0
      %v1885 = vadd.f32 %v1709, %v1884
      %v1886 = vpop.f32.mrb[0].mxu0
      %v1887 = vadd.f32 %v1709, %v1886
      %v1888 = vpop.f32.mrb[0].mxu0
      %v1889 = vadd.f32 %v1714, %v1888
      %v1890 = vpop.f32.mrb[0].mxu0
      %v1891 = vadd.f32 %v1714, %v1890
      %1892 = vmatprep.mubr.bf16.mxu0 0
      %1893 = vmatmul.mubr.bf16.gmra.mrb[0].mxu0 %v1788
      %v1894 = vpop.f32.mrb[0].mxu0
      %v1895 = vadd.f32 %v1719, %v1894
      %v1896 = vpop.f32.mrb[0].mxu0
      %v1897 = vadd.f32 %v1719, %v1896
      %v1898 = vpop.f32.mrb[0].mxu0
      %v1899 = vadd.f32 %v1724, %v1898
      %v1900 = vpop.f32.mrb[0].mxu0
      %v1901 = vadd.f32 %v1724, %v1900
      %1902 = vdwg.mxu0
      %v1903 = vmax.f32 %v1825, 0.0
      %v1904 = vmax.f32 %v1827, 0.0
      %v1905 = vmax.f32 %v1829, 0.0
      %v1906 = vmax.f32 %v1831, 0.0
      %v1907 = vmax.f32 %v1835, 0.0
      %v1908 = vmax.f32 %v1837, 0.0
      %v1909 = vmax.f32 %v1839, 0.0
      %v1910 = vmax.f32 %v1841, 0.0
      %v1911 = vmax.f32 %v1845, 0.0
      %v1912 = vmax.f32 %v1847, 0.0
      %v1913 = vmax.f32 %v1849, 0.0
      %v1914 = vmax.f32 %v1851, 0.0
      %v1915 = vmax.f32 %v1855, 0.0
      %v1916 = vmax.f32 %v1857, 0.0
      %v1917 = vmax.f32 %v1859, 0.0
      %v1918 = vmax.f32 %v1861, 0.0
      %v1919 = vmax.f32 %v1865, 0.0
      %v1920 = vmax.f32 %v1867, 0.0
      %v1921 = vmax.f32 %v1869, 0.0
      %v1922 = vmax.f32 %v1871, 0.0
      %v1923 = vmax.f32 %v1875, 0.0
      %v1924 = vmax.f32 %v1877, 0.0
      %v1925 = vmax.f32 %v1879, 0.0
      %v1926 = vmax.f32 %v1881, 0.0
      %v1927 = vmax.f32 %v1885, 0.0
      %v1928 = vmax.f32 %v1887, 0.0
      %v1929 = vmax.f32 %v1889, 0.0
      %v1930 = vmax.f32 %v1891, 0.0
      %v1931 = vmax.f32 %v1895, 0.0
      %v1932 = vmax.f32 %v1897, 0.0
      %v1933 = vmax.f32 %v1899, 0.0
      %v1934 = vmax.f32 %v1901, 0.0
      %v1935 = vpack.c.bf16 %v1905, %v1903
      %v1936 = vpack.c.bf16 %v1906, %v1904
      %v1937 = vpack.c.bf16 %v1909, %v1907
      %v1938 = vpack.c.bf16 %v1910, %v1908
      %v1939 = vpack.c.bf16 %v1913, %v1911
      %v1940 = vpack.c.bf16 %v1914, %v1912
      %v1941 = vpack.c.bf16 %v1917, %v1915
      %v1942 = vpack.c.bf16 %v1918, %v1916
      %v1943 = vpack.c.bf16 %v1921, %v1919
      %v1944 = vpack.c.bf16 %v1922, %v1920
      %v1945 = vpack.c.bf16 %v1925, %v1923
      %v1946 = vpack.c.bf16 %v1926, %v1924
      %v1947 = vpack.c.bf16 %v1929, %v1927
      %v1948 = vpack.c.bf16 %v1930, %v1928
      %v1949 = vpack.c.bf16 %v1933, %v1931
      %v1950 = vpack.c.bf16 %v1934, %v1932
      %v1951 = vld [vmem:[%s3 + $0xc] sm:$0xf]
      %v1952 = vld [vmem:[%s3 + $0x1c] sm:$0xf]
      %v1953 = vld [vmem:[%s3 + $0x2c] sm:$0xf]
      %v1954 = vld [vmem:[%s3 + $0x3c] sm:$0xf]
      %v1955 = vld [vmem:[%s3 + $0x4c] sm:$0xf]
      %v1956 = vld [vmem:[%s3 + $0x5c] sm:$0xf]
      %v1957 = vld [vmem:[%s3 + $0x6c] sm:$0xf]
      %v1958 = vld [vmem:[%s3 + $0x7c] sm:$0xf]
      %v1967 = vunpack.c.l.b16 %v1951
      %v1968 = vunpack.c.l.b16 %v1952
      %v1969 = vunpack.c.l.b16 %v1953
      %v1970 = vunpack.c.l.b16 %v1954
      %v1971 = vunpack.c.l.b16 %v1955
      %v1972 = vunpack.c.l.b16 %v1956
      %v1973 = vunpack.c.l.b16 %v1957
      %v1974 = vunpack.c.l.b16 %v1958
      %v1975 = vpack.c.b16 %v1968, %v1967
      %v1976 = vpack.c.b16 %v1970, %v1969
      %v1977 = vpack.c.b16 %v1972, %v1971
      %v1978 = vpack.c.b16 %v1974, %v1973
      %1983 = vmatprep.subr.bf16.mxu0 %v1936
      %1984 = vmatpush1.bf16.msra.mxu0 %v1935
      %1985 = vmatprep.subr.bf16.mxu0 %v1938
      %1986 = vmatpush1.bf16.msra.mxu0 %v1937
      %1987 = vmatprep.subr.bf16.mxu0 %v1940
      %1988 = vmatpush1.bf16.msra.mxu0 %v1939
      %1989 = vmatprep.subr.bf16.mxu0 %v1942
      %1990 = vmatpush1.bf16.msra.mxu0 %v1941
      %1991 = vmatprep.subr.bf16.mxu0 %v1944
      %1992 = vmatpush1.bf16.msra.mxu0 %v1943
      %1993 = vmatprep.subr.bf16.mxu0 %v1946
      %1994 = vmatpush1.bf16.msra.mxu0 %v1945
      %1995 = vmatprep.subr.bf16.mxu0 %v1948
      %1996 = vmatpush1.bf16.msra.mxu0 %v1947
      %1997 = vmatprep.subr.bf16.mxu0 %v1950
      %1998 = vmatpush1.bf16.msra.mxu0 %v1949
      %1999 = vmatprep.subr.bf16.mxu0 0
      %2000 = vmatpush1.bf16.msra.mxu0 0
      %2001 = vmatprep.subr.bf16.mxu0 0
      %2002 = vmatpush1.bf16.msra.mxu0 0
      %2003 = vmatprep.subr.bf16.mxu0 0
      %2004 = vmatpush1.bf16.msra.mxu0 0
      %2005 = vmatprep.subr.bf16.mxu0 0
      %2006 = vmatpush1.bf16.msra.mxu0 0
      %2007 = vmatprep.subr.bf16.mxu0 0
      %2008 = vmatpush1.bf16.msra.mxu0 0
      %2009 = vmatprep.subr.bf16.mxu0 0
      %2010 = vmatpush1.bf16.msra.mxu0 0
      %2011 = vmatprep.subr.bf16.mxu0 0
      %2012 = vmatpush1.bf16.msra.mxu0 0
      %2013 = vmatprep.subr.bf16.mxu0 0
      %2014 = vmatpush1.bf16.msra.mxu0 0
      %2015 = vmatprep.mubr.bf16.mxu0 0
      %2016 = vmatmul.mubr.bf16.gmra.mrb[0].mxu0 %v1975
      %v2017 = vpop.f32.mrb[0].mxu0
      %v2018 = vadd.f32 0.0, %v2017
      %v2019 = vpop.f32.mrb[0].mxu0
      %v2020 = vadd.f32 0.0, %v2019
      %v2021 = vpop.f32.mrb[0].mxu0
      %v2022 = vadd.f32 0.0, %v2021
      %v2023 = vpop.f32.mrb[0].mxu0
      %v2024 = vadd.f32 0.0, %v2023
      %2025 = vmatprep.mubr.bf16.mxu0 0
      %2026 = vmatmul.mubr.bf16.gmra.mrb[0].mxu0 %v1976
      %v2027 = vpop.f32.mrb[0].mxu0
      %v2028 = vadd.f32 0.0, %v2027
      %v2029 = vpop.f32.mrb[0].mxu0
      %v2030 = vadd.f32 0.0, %v2029
      %v2031 = vpop.f32.mrb[0].mxu0
      %v2032 = vadd.f32 0.0, %v2031
      %v2033 = vpop.f32.mrb[0].mxu0
      %v2034 = vadd.f32 0.0, %v2033
      %2035 = vmatprep.mubr.bf16.mxu0 0
      %2036 = vmatmul.mubr.bf16.gmra.mrb[0].mxu0 %v1977
      %v2037 = vpop.f32.mrb[0].mxu0
      %v2038 = vadd.f32 0.0, %v2037
      %v2039 = vpop.f32.mrb[0].mxu0
      %v2040 = vadd.f32 0.0, %v2039
      %v2041 = vpop.f32.mrb[0].mxu0
      %v2042 = vadd.f32 0.0, %v2041
      %v2043 = vpop.f32.mrb[0].mxu0
      %v2044 = vadd.f32 0.0, %v2043
      %2045 = vmatprep.mubr.bf16.mxu0 0
      %2046 = vmatmul.mubr.bf16.gmra.mrb[0].mxu0 %v1978
      %v2047 = vpop.f32.mrb[0].mxu0
      %v2048 = vadd.f32 0.0, %v2047
      %v2049 = vpop.f32.mrb[0].mxu0
      %v2050 = vadd.f32 0.0, %v2049
      %v2051 = vpop.f32.mrb[0].mxu0
      %v2052 = vadd.f32 0.0, %v2051
      %v2053 = vpop.f32.mrb[0].mxu0
      %v2054 = vadd.f32 0.0, %v2053
      %2055 = vdwg.mxu0
      %v2056 = vadd.f32 %v1598, %v2018
      %v2057 = vadd.f32 %v1599, %v2020
      %v2058 = vadd.f32 %v1600, %v2022
      %v2059 = vadd.f32 %v1601, %v2024
      %v2060 = vadd.f32 %v1602, %v2028
      %v2061 = vadd.f32 %v1603, %v2030
      %v2062 = vadd.f32 %v1604, %v2032
      %v2063 = vadd.f32 %v1605, %v2034
      %v2064 = vadd.f32 %v1606, %v2038
      %v2065 = vadd.f32 %v1607, %v2040
      %v2066 = vadd.f32 %v1608, %v2042
      %v2067 = vadd.f32 %v1609, %v2044
      %v2068 = vadd.f32 %v1610, %v2048
      %v2069 = vadd.f32 %v1611, %v2050
      %v2070 = vadd.f32 %v1612, %v2052
      %v2071 = vadd.f32 %v1613, %v2054
      %v2072 = vld [vmem:[%s4] sm:$0xff]
      %v2073 = vld [vmem:[%s4 + $0x8] sm:$0xff]
      %v2074 = vld [vmem:[%s4 + $0x10] sm:$0xff]
      %v2075 = vld [vmem:[%s4 + $0x18] sm:$0xff]
      %v2076 = vld [vmem:[%s4 + $0x20] sm:$0xff]
      %v2077 = vld [vmem:[%s4 + $0x28] sm:$0xff]
      %v2078 = vld [vmem:[%s4 + $0x30] sm:$0xff]
      %v2079 = vld [vmem:[%s4 + $0x38] sm:$0xff]
      %2081 = vset.pattern.permute.xlu0 0
      %2082 = vperm.xlu0 %2081, %v2072
      %v2083 = vpop.permute.xlu0 %2082
      %2086 = vset.pattern.permute.xlu0 0
      %2087 = vperm.xlu0 %2086, %v2073
      %v2088 = vpop.permute.xlu0 %2087
      %2091 = vset.pattern.permute.xlu0 0
      %2092 = vperm.xlu0 %2091, %v2074
      %v2093 = vpop.permute.xlu0 %2092
      %2096 = vset.pattern.permute.xlu0 0
      %2097 = vperm.xlu0 %2096, %v2075
      %v2098 = vpop.permute.xlu0 %2097
      %2101 = vset.pattern.permute.xlu0 0
      %2102 = vperm.xlu0 %2101, %v2076
      %v2103 = vpop.permute.xlu0 %2102
      %2106 = vset.pattern.permute.xlu0 0
      %2107 = vperm.xlu0 %2106, %v2077
      %v2108 = vpop.permute.xlu0 %2107
      %2111 = vset.pattern.permute.xlu0 0
      %2112 = vperm.xlu0 %2111, %v2078
      %v2113 = vpop.permute.xlu0 %2112
      %2116 = vset.pattern.permute.xlu0 0
      %2117 = vperm.xlu0 %2116, %v2079
      %v2118 = vpop.permute.xlu0 %2117
      %v2120 = vadd.f32 %v2056, %v2083
      %v2121 = vadd.f32 %v2057, %v2083
      %v2122 = vadd.f32 %v2058, %v2088
      %v2123 = vadd.f32 %v2059, %v2088
      %v2124 = vadd.f32 %v2060, %v2093
      %v2125 = vadd.f32 %v2061, %v2093
      %v2126 = vadd.f32 %v2062, %v2098
      %v2127 = vadd.f32 %v2063, %v2098
      %v2128 = vadd.f32 %v2064, %v2103
      %v2129 = vadd.f32 %v2065, %v2103
      %v2130 = vadd.f32 %v2066, %v2108
      %v2131 = vadd.f32 %v2067, %v2108
      %v2132 = vadd.f32 %v2068, %v2113
      %v2133 = vadd.f32 %v2069, %v2113
      %v2134 = vadd.f32 %v2070, %v2118
      %v2135 = vadd.f32 %v2071, %v2118
      %v2136 = vmax.f32 %v2120, 0.0
      %v2137 = vmax.f32 %v2121, 0.0
      %v2138 = vmax.f32 %v2122, 0.0
      %v2139 = vmax.f32 %v2123, 0.0
      %v2140 = vmax.f32 %v2124, 0.0
      %v2141 = vmax.f32 %v2125, 0.0
      %v2142 = vmax.f32 %v2126, 0.0
      %v2143 = vmax.f32 %v2127, 0.0
      %v2144 = vmax.f32 %v2128, 0.0
      %v2145 = vmax.f32 %v2129, 0.0
      %v2146 = vmax.f32 %v2130, 0.0
      %v2147 = vmax.f32 %v2131, 0.0
      %v2148 = vmax.f32 %v2132, 0.0
      %v2149 = vmax.f32 %v2133, 0.0
      %v2150 = vmax.f32 %v2134, 0.0
      %v2151 = vmax.f32 %v2135, 0.0
      %v2152 = vpack.c.bf16 %v2138, %v2136
      %v2153 = vpack.c.bf16 %v2139, %v2137
      %v2154 = vpack.c.bf16 %v2142, %v2140
      %v2155 = vpack.c.bf16 %v2143, %v2141
      %v2156 = vpack.c.bf16 %v2146, %v2144
      %v2157 = vpack.c.bf16 %v2147, %v2145
      %v2158 = vpack.c.bf16 %v2150, %v2148
      %v2159 = vpack.c.bf16 %v2151, %v2149
      %v2168 = vunpack.c.l.b16 %v2152
      %v2169 = vunpack.c.l.b16 %v2153
      %v2170 = vunpack.c.h.b16 %v2152
      %v2171 = vunpack.c.h.b16 %v2153
      %v2172 = vunpack.c.l.b16 %v2154
      %v2173 = vunpack.c.l.b16 %v2155
      %v2174 = vunpack.c.h.b16 %v2154
      %v2175 = vunpack.c.h.b16 %v2155
      %v2176 = vunpack.c.l.b16 %v2156
      %v2177 = vunpack.c.l.b16 %v2157
      %v2178 = vunpack.c.h.b16 %v2156
      %v2179 = vunpack.c.h.b16 %v2157
      %v2180 = vunpack.c.l.b16 %v2158
      %v2181 = vunpack.c.l.b16 %v2159
      %v2182 = vunpack.c.h.b16 %v2158
      %v2183 = vunpack.c.h.b16 %v2159
      %v2184 = vpack.c.b16 %v2169, %v2168
      %v2185 = vpack.c.b16 %v2171, %v2170
      %v2186 = vpack.c.b16 %v2173, %v2172
      %v2187 = vpack.c.b16 %v2175, %v2174
      %v2188 = vpack.c.b16 %v2177, %v2176
      %v2189 = vpack.c.b16 %v2179, %v2178
      %v2190 = vpack.c.b16 %v2181, %v2180
      %v2191 = vpack.c.b16 %v2183, %v2182
      %2200 = vst [vmem:[%s262] sm:$0xff] %v2184
      %2201 = vst [vmem:[%s262 + $0x8] sm:$0xff] %v2185
      %2202 = vst [vmem:[%s262 + $0x10] sm:$0xff] %v2186
      %2203 = vst [vmem:[%s262 + $0x18] sm:$0xff] %v2187
      %2204 = vst [vmem:[%s262 + $0x20] sm:$0xff] %v2188
      %2205 = vst [vmem:[%s262 + $0x28] sm:$0xff] %v2189
      %2206 = vst [vmem:[%s262 + $0x30] sm:$0xff] %v2190
      %2207 = vst [vmem:[%s262 + $0x38] sm:$0xff] %v2191
      %s2208 = smul.u32 2, %s21
      %p2209 = scmp.lt.s32.totalorder %s20, 1
      %s2210 = scalar_select %p2209, %s20, 1
      %p2211 = scmp.lt.s32.totalorder %s2208, 1
      %s2212 = scalar_select %p2211, %s2208, 1
      %s2213 = smul.addr %s2210, 16
      %s2214 = sadd.s32 %s2212, %s2213
      %s2215 = smul.addr %s2214, 4
      %s2216 = scalar_lea.vmem %s5, %s2215
      // Predicated region
      $region41: #{key_encoder_forward.1} parent=39 // pred_check
        %p2217 = pneg %p160
      $region42: #{key_encoder_forward.1} parent=39 // pred_check_branch
        %2219 = sbr.rel (%p2217) target = $region44
      $region43: #{key_encoder_forward.1} parent=39 // pred_region
        %s2220 = smul.u32 2, %s21
      $region44: #{key_encoder_forward.1} parent=39 // pred_fallthru
        _
    $region40: #{key_encoder_forward.1} parent=5 // pred_fallthru
      _
    %p2221 = scmp.le.s32.totalorder 2, %s11
    // Predicated region
    $region45: #{key_encoder_forward.1} parent=5 // pred_check
      %p2222 = pneg %p2221
    $region46: #{key_encoder_forward.1} parent=5 // pred_check_branch
      %2224 = sbr.rel (%p2222) target = $region48
    $region47: #{key_encoder_forward.1} parent=5 // pred_region
      %s2225 = ssub.s32 %s11, 2
      // Predicated region
      $region49: #{key_encoder_forward.1} parent=47 // pred_check
        %p2226 = pneg %p166
      $region50: #{key_encoder_forward.1} parent=47 // pred_check_branch
        %2228 = sbr.rel (%p2226) target = $region52
      $region51: #{key_encoder_forward.1} parent=47 // pred_region
        %s2229 = smul.u32 2, %s23
        %p2230 = scmp.lt.s32.totalorder %s22, 1
        %s2231 = scalar_select %p2230, %s22, 1
        %p2232 = scmp.lt.s32.totalorder %s2229, 1
        %s2233 = scalar_select %p2232, %s2229, 1
        %s2234 = smul.addr %s2231, 16
        %s2235 = sadd.s32 %s2233, %s2234
        %s2236 = smul.addr %s2235, 4
        %s2237 = scalar_lea.vmem %s5, %s2236
      $region52: #{key_encoder_forward.1} parent=47 // pred_fallthru
        _
    $region48: #{key_encoder_forward.1} parent=5 // pred_fallthru
      _
  $region6: #{key_encoder_forward.1} parent=0 // loop_footer
    %s15 = sadd.s32 1, %s11
  $region7: #{key_encoder_forward.1} parent=0 // loop_footer_branch
    %10 = sbr.rel target = $region3
  $region8: #{key_encoder_forward.1} parent=0 // loop_exit
    _

</llo_original>
